<compile_context>
chip_gen: v6e
topology: v6e:2x2x1
jax: 0.10.0
libtpu: 0.0.40
codegen_flags: <defaults>
</compile_context>

<pallas_src>
import functools

import jax
import jax.numpy as jnp
from jax import lax
from jax.experimental import pallas as pl
from jax.experimental.pallas import tpu as pltpu


def _leaky_relu(x, slope=0.2):
    return jnp.where(x > 0, x, slope * x)


# --------------------------------------------------------------------------
# Fused coupling-layer kernel (one grid step = block_b images, lane-folded)
# --------------------------------------------------------------------------
def _coupling_kernel(x_ref, mask_ref,
                     w1a_ref, b1a_ref, w2a_ref, b2a_ref, w3a_ref, b3a_ref,
                     w1b_ref, b1b_ref, w2b_ref, b2b_ref, w3b_ref, b3b_ref,
                     y_ref, col_ref,
                     *, k, W, split1, split2, clamp):
    pad = (k - 1) // 2
    taps = k * k
    lanes = x_ref.shape[1]                      # block_b * H * W
    f32 = jnp.float32
    bf16 = jnp.bfloat16

    mask = mask_ref[...]                        # (k*k, lanes) 0/1 f32 tap validity

    def im2col(x):
        """x: (cin, lanes) f32 -> write (k*k*cin, lanes) bf16 stack into col_ref
        and return it (prefix view)."""
        cin = x.shape[0]
        for dy in range(k):
            for dx in range(k):
                t = dy * k + dx
                off = (dy - pad) * W + (dx - pad)
                if off == 0:
                    sh = x                      # centre tap: always valid
                else:
                    # shifted[p] = x[p + off] (cyclic); invalid columns masked to 0.
                    sh = pltpu.roll(x, (-off) % lanes, 1) * mask[t:t + 1, :]
                col_ref[t * cin:(t + 1) * cin, :] = sh.astype(bf16)
        return col_ref[:taps * cin, :]

    def bottleneck(x, w1_ref, b1_ref, w2_ref, b2_ref, w3_ref, b3_ref):
        # conv1: k x k  -> one dot over K = k*k*cin
        h = jnp.dot(w1_ref[...], im2col(x),
                    preferred_element_type=f32) + b1_ref[...]
        h = _leaky_relu(h)
        # conv2: 1 x 1
        h = jnp.dot(w2_ref[...], h.astype(bf16),
                    preferred_element_type=f32) + b2_ref[...]
        h = _leaky_relu(h)
        # conv3: k x k over the fused (2*cout)-channel intermediate
        return (jnp.dot(w3_ref[...], im2col(h),
                        preferred_element_type=f32) + b3_ref[...])

    x = x_ref[...]                              # (C, lanes) f32
    x1 = x[:split1, :]
    x2 = x[split1:, :]

    # fused [G2 | H2] applied to x2  -> (2*split1, lanes)
    gh2 = bottleneck(x2, w1a_ref, b1a_ref, w2a_ref, b2a_ref, w3a_ref, b3a_ref)
    # sigmoid(g)*2 - 1 == tanh(g/2)
    y1 = x1 * jnp.exp(clamp * jnp.tanh(0.5 * gh2[:split1, :])) + gh2[split1:, :]

    # fused [G1 | H1] applied to y1  -> (2*split2, lanes)
    gh1 = bottleneck(y1, w1b_ref, b1b_ref, w2b_ref, b2b_ref, w3b_ref, b3b_ref)
    y2 = x2 * jnp.exp(clamp * jnp.tanh(0.5 * gh1[:split2, :])) + gh1[split2:, :]

    # single full (unmasked) store of the whole output slab
    y_ref[...] = jnp.concatenate([y1, y2], axis=0).astype(y_ref.dtype)


# --------------------------------------------------------------------------
# Host-side parameter packing
# --------------------------------------------------------------------------
def _pack_conv_w(w_hwio):
    """(k, k, Cin, Cout) HWIO -> (Cout, k*k*Cin); column index = (dy*k+dx)*Cin + i."""
    kh, kw, cin, cout = w_hwio.shape
    return jnp.transpose(w_hwio, (3, 0, 1, 2)).reshape(cout, kh * kw * cin)


def _fuse_branch_params(p_g, p_h):
    """Fuse the G and H bottlenecks that share an input into one bottleneck with
    block-diagonal weights: fused(x) = [G(x) | H(x)] along output channels.
    Matmul weights packed (Cout, K) bf16; biases stay (Cout, 1) f32."""
    w1g, b1g, w2g, b2g, w3g, b3g = p_g
    w1h, b1h, w2h, b2h, w3h, b3h = p_h
    c = w1g.shape[-1]
    f32, bf16 = jnp.float32, jnp.bfloat16
    # conv1 (k x k): concatenate output channels.
    w1 = _pack_conv_w(jnp.concatenate([w1g, w1h], axis=3)).astype(bf16)
    b1 = jnp.concatenate([b1g, b1h]).reshape(2 * c, 1).astype(f32)
    # conv2 (1 x 1): block-diagonal, left-multiply form (out, in).
    z = jnp.zeros((c, c), f32)
    w2 = jnp.concatenate(
        [jnp.concatenate([w2g.T, z], axis=1),
         jnp.concatenate([z, w2h.T], axis=1)], axis=0).astype(bf16)
    b2 = jnp.concatenate([b2g, b2h]).reshape(2 * c, 1).astype(f32)
    # conv3 (k x k): block-diagonal in (Cin, Cout).
    z3 = jnp.zeros(w3g.shape, f32)
    w3_hwio = jnp.concatenate(
        [jnp.concatenate([w3g, z3], axis=3),
         jnp.concatenate([z3, w3h], axis=3)], axis=2)
    w3 = _pack_conv_w(w3_hwio).astype(bf16)
    b3 = jnp.concatenate([b3g, b3h]).reshape(2 * c, 1).astype(f32)
    return (w1, b1, w2, b2, w3, b3)


def _make_tap_masks(H, W, k, block_b):
    """(k*k, block_b*H*W) 0/1 masks: validity of tap (dy,dx) at every output pixel.
    Covers x row-wrap, y out-of-bounds, and folded-image boundaries (so a cyclic
    lane roll over the whole batch slab is safe)."""
    pad = (k - 1) // 2
    ys = jnp.repeat(jnp.arange(H), W)
    xs = jnp.tile(jnp.arange(W), H)
    rows = []
    for dy in range(k):
        for dx in range(k):
            oy, ox = dy - pad, dx - pad
            valid = ((ys + oy >= 0) & (ys + oy < H) &
                     (xs + ox >= 0) & (xs + ox < W))
            rows.append(valid.astype(jnp.float32))
    m = jnp.stack(rows, axis=0)                 # (k*k, H*W)
    return jnp.tile(m, (1, block_b))            # (k*k, block_b*H*W)


def _pick_block_b(n, max_b=32):
    """Largest divisor of n that is <= max_b while keeping >= 2 grid steps
    (keeps both v7x TensorCores busy under dimension_semantics=('parallel',))."""
    best = 1
    for b in range(1, min(n, max_b) + 1):
        if n % b == 0 and n // b >= 2:
            best = b
    return best


# --------------------------------------------------------------------------
# CouplingLayer.forward(x, rev=False)
# --------------------------------------------------------------------------
def coupling_forward(x_nchw, params, split1, split2, k, clamp, block_b=None):
    N, C, H, W = x_nchw.shape
    assert C == split1 + split2
    HW = H * W
    if block_b is None:
        block_b = _pick_block_b(N)
    assert N % block_b == 0
    LB = block_b * HW                           # lane width per grid step

    # Lane-dense layout: channels on sublanes, (image, y, x) flattened on lanes.
    xt = jnp.transpose(x_nchw.reshape(N, C, HW).astype(jnp.float32),
                       (1, 0, 2)).reshape(C, N * HW)

    mask = _make_tap_masks(H, W, k, block_b)
    p_a = _fuse_branch_params(params["G2"], params["H2"])   # acts on x2
    p_b = _fuse_branch_params(params["G1"], params["H1"])   # acts on y1

    kern = functools.partial(_coupling_kernel, k=k, W=W,
                             split1=split1, split2=split2, clamp=float(clamp))

    def _const_spec(p):
        nd = p.ndim
        return pl.BlockSpec(p.shape, lambda n: (0,) * nd)

    col_rows = k * k * 2 * max(split1, split2)  # largest im2col stack (conv3)

    y = pl.pallas_call(
        kern,
        out_shape=jax.ShapeDtypeStruct((C, N * HW), jnp.float32),
        grid_spec=pltpu.PrefetchScalarGridSpec(
            num_scalar_prefetch=0,
            grid=(N // block_b,),
            in_specs=[pl.BlockSpec((C, LB), lambda n: (0, n)),
                      _const_spec(mask),
                      *[_const_spec(p) for p in (*p_a, *p_b)]],
            out_specs=pl.BlockSpec((C, LB), lambda n: (0, n)),
            scratch_shapes=[pltpu.VMEM((col_rows, LB), jnp.bfloat16)],
        ),
        compiler_params=pltpu.CompilerParams(
            dimension_semantics=("parallel",)),
    )(xt, mask, *p_a, *p_b)

    return jnp.transpose(y.reshape(C, N, HW), (1, 0, 2)).reshape(N, C, H, W)


# --------------------------------------------------------------------------
# Pure-JAX reference (independent oracle, f32/HIGHEST precision convs)
# --------------------------------------------------------------------------
def _bottleneck_ref(x_nhwc, p, k):
    w1, b1, w2, b2, w3, b3 = p
    pd = (k - 1) // 2

    def conv(inp, w, pad_):
        return lax.conv_general_dilated(
            inp, w, window_strides=(1, 1),
            padding=[(pad_, pad_), (pad_, pad_)],
            dimension_numbers=("NHWC", "HWIO", "NHWC"),
            precision=lax.Precision.HIGHEST)

    h = _leaky_relu(conv(x_nhwc, w1, pd) + b1)
    h = _leaky_relu(conv(h, w2.reshape(1, 1, *w2.shape), 0) + b2)
    return conv(h, w3, pd) + b3


def coupling_forward_ref(x_nchw, params, split1, split2, k, clamp):
    x = jnp.transpose(x_nchw, (0, 2, 3, 1))
    x1 = x[..., :split1]
    x2 = x[..., split1:split1 + split2]

    def couple(xa, g, h):
        s = 2.0 / (1.0 + jnp.exp(-g)) - 1.0
        return xa * jnp.exp(clamp * s) + h

    y1 = couple(x1, _bottleneck_ref(x2, params["G2"], k),
                _bottleneck_ref(x2, params["H2"], k))
    y2 = couple(x2, _bottleneck_ref(y1, params["G1"], k),
                _bottleneck_ref(y1, params["H1"], k))
    return jnp.transpose(jnp.concatenate([y1, y2], axis=-1), (0, 3, 1, 2))


# --------------------------------------------------------------------------
# Deterministic parameter init (shapes from Bottleneck.__init__).
# PyTorch zero-initializes conv3 and the biases; small non-zero deterministic
# values are used here so every code path (incl. biases) is exercised.
# --------------------------------------------------------------------------
def make_bottleneck_params(key, cin, cout, k):
    k1, k2, k3, k4 = jax.random.split(key, 4)
    w1 = jax.random.normal(k1, (k, k, cin, cout), jnp.float32) * 0.1   # HWIO
    w2 = jax.random.normal(k2, (cout, cout), jnp.float32) * 0.1        # (Cin, Cout)
    w3 = jax.random.normal(k3, (k, k, cout, cout), jnp.float32) * 0.05
    kb1, kb2, kb3 = jax.random.split(k4, 3)
    b1 = jax.random.normal(kb1, (cout,), jnp.float32) * 0.05
    b2 = jax.random.normal(kb2, (cout,), jnp.float32) * 0.05
    b3 = jax.random.normal(kb3, (cout,), jnp.float32) * 0.05
    return (w1, b1, w2, b2, w3, b3)


if __name__ == "__main__":
    key = jax.random.PRNGKey(0)
    N, H, W = 2, 16, 16
    split1, split2 = 4, 4
    k = 3
    clamp = 1.0

    kx, kg1, kg2, kh1, kh2 = jax.random.split(key, 5)
    x = jax.random.normal(kx, (N, split1 + split2, H, W), jnp.float32)  # NCHW
    params = {
        "G1": make_bottleneck_params(kg1, split1, split2, k),
        "G2": make_bottleneck_params(kg2, split2, split1, k),
        "H1": make_bottleneck_params(kh1, split1, split2, k),
        "H2": make_bottleneck_params(kh2, split2, split1, k),
    }

    out = coupling_forward(x, params, split1, split2, k, clamp)
    out = jax.block_until_ready(out)

    ref = coupling_forward_ref(x, params, split1, split2, k, clamp)
    assert out.shape == x.shape and out.dtype == x.dtype
    # Tolerance reflects bf16 MXU operands in the kernel vs a HIGHEST-precision
    # f32 reference (accumulation is f32 in both).
    if not jnp.allclose(out, ref, atol=1e-2, rtol=1e-2):
        max_err = float(jnp.max(jnp.abs(out - ref)))
        raise AssertionError(
            f"Pallas output does not match JAX reference (max abs err {max_err:.3e})")
    print("KERNEL_OK")
</pallas_src>

<mosaic_0001>
module attributes {stable_mosaic.version = 11 : i64} {
  func.func @_coupling_kernel(%arg0: i32, %arg1: memref<8x256xf32, #tpu.memory_space<vmem>>, %arg2: memref<9x256xf32, #tpu.memory_space<vmem>>, %arg3: memref<8x36xbf16, #tpu.memory_space<vmem>>, %arg4: memref<8x1xf32, #tpu.memory_space<vmem>>, %arg5: memref<8x8xbf16, #tpu.memory_space<vmem>>, %arg6: memref<8x1xf32, #tpu.memory_space<vmem>>, %arg7: memref<8x72xbf16, #tpu.memory_space<vmem>>, %arg8: memref<8x1xf32, #tpu.memory_space<vmem>>, %arg9: memref<8x36xbf16, #tpu.memory_space<vmem>>, %arg10: memref<8x1xf32, #tpu.memory_space<vmem>>, %arg11: memref<8x8xbf16, #tpu.memory_space<vmem>>, %arg12: memref<8x1xf32, #tpu.memory_space<vmem>>, %arg13: memref<8x72xbf16, #tpu.memory_space<vmem>>, %arg14: memref<8x1xf32, #tpu.memory_space<vmem>>, %arg15: memref<8x256xf32, #tpu.memory_space<vmem>>, %arg16: memref<72x256xbf16, #tpu.memory_space<vmem>>) attributes {dimension_semantics = [#tpu.dimension_semantics<parallel>], iteration_bounds = array<i64: 2>, scalar_prefetch = 0 : i64, scratch_operands = 1 : i64, tpu.core_type = #tpu.core_type<tc>, window_params = [{transform_indices = @transform_0, window_bounds = array<i64: 8, 256>}, {pipeline_mode = #tpu.pipeline_mode<synchronous>, transform_indices = @transform_1, window_bounds = array<i64: 9, 256>}, {pipeline_mode = #tpu.pipeline_mode<synchronous>, transform_indices = @transform_2, window_bounds = array<i64: 8, 36>}, {pipeline_mode = #tpu.pipeline_mode<synchronous>, transform_indices = @transform_3, window_bounds = array<i64: 8, 1>}, {pipeline_mode = #tpu.pipeline_mode<synchronous>, transform_indices = @transform_4, window_bounds = array<i64: 8, 8>}, {pipeline_mode = #tpu.pipeline_mode<synchronous>, transform_indices = @transform_5, window_bounds = array<i64: 8, 1>}, {pipeline_mode = #tpu.pipeline_mode<synchronous>, transform_indices = @transform_6, window_bounds = array<i64: 8, 72>}, {pipeline_mode = #tpu.pipeline_mode<synchronous>, transform_indices = @transform_7, window_bounds = array<i64: 8, 1>}, {pipeline_mode = #tpu.pipeline_mode<synchronous>, transform_indices = @transform_8, window_bounds = array<i64: 8, 36>}, {pipeline_mode = #tpu.pipeline_mode<synchronous>, transform_indices = @transform_9, window_bounds = array<i64: 8, 1>}, {pipeline_mode = #tpu.pipeline_mode<synchronous>, transform_indices = @transform_10, window_bounds = array<i64: 8, 8>}, {pipeline_mode = #tpu.pipeline_mode<synchronous>, transform_indices = @transform_11, window_bounds = array<i64: 8, 1>}, {pipeline_mode = #tpu.pipeline_mode<synchronous>, transform_indices = @transform_12, window_bounds = array<i64: 8, 72>}, {pipeline_mode = #tpu.pipeline_mode<synchronous>, transform_indices = @transform_13, window_bounds = array<i64: 8, 1>}, {transform_indices = @transform_14, window_bounds = array<i64: 8, 256>}]} {
    %c0 = arith.constant 0 : index
    %c0_0 = arith.constant 0 : index
    %0 = vector.load %arg2[%c0, %c0_0] : memref<9x256xf32, #tpu.memory_space<vmem>>, vector<9x256xf32>
    %c0_1 = arith.constant 0 : index
    %c0_2 = arith.constant 0 : index
    %1 = vector.load %arg1[%c0_1, %c0_2] : memref<8x256xf32, #tpu.memory_space<vmem>>, vector<8x256xf32>
    %2 = vector.extract_strided_slice %1 {offsets = [0, 0], sizes = [4, 256], strides = [1, 1]} : vector<8x256xf32> to vector<4x256xf32>
    %3 = vector.extract_strided_slice %1 {offsets = [4, 0], sizes = [4, 256], strides = [1, 1]} : vector<8x256xf32> to vector<4x256xf32>
    %c0_3 = arith.constant 0 : index
    %c0_4 = arith.constant 0 : index
    %4 = vector.load %arg3[%c0_3, %c0_4] : memref<8x36xbf16, #tpu.memory_space<vmem>>, vector<8x36xbf16>
    %c17_i32 = arith.constant 17 : i32
    %5 = tpu.dynamic_rotate %3 by %c17_i32 dim 1 : vector<4x256xf32>, i32 -> vector<4x256xf32>
    %6 = vector.extract_strided_slice %0 {offsets = [0, 0], sizes = [1, 256], strides = [1, 1]} : vector<9x256xf32> to vector<1x256xf32>
    %7 = vector.broadcast %6 : vector<1x256xf32> to vector<4x256xf32>
    %8 = arith.mulf %5, %7 : vector<4x256xf32>
    %9 = arith.truncf %8 : vector<4x256xf32> to vector<4x256xbf16>
    %c0_5 = arith.constant 0 : index
    %c0_6 = arith.constant 0 : index
    %10 = vector.load %arg16[%c0_5, %c0_6] : memref<72x256xbf16, #tpu.memory_space<vmem>>, vector<4x256xbf16>
    tpu.vector_store %arg16[%c0_5, %c0_6], %9 {strides = array<i32>} : memref<72x256xbf16, #tpu.memory_space<vmem>>, vector<4x256xbf16>,
    %c16_i32 = arith.constant 16 : i32
    %11 = tpu.dynamic_rotate %3 by %c16_i32 dim 1 : vector<4x256xf32>, i32 -> vector<4x256xf32>
    %12 = vector.extract_strided_slice %0 {offsets = [1, 0], sizes = [1, 256], strides = [1, 1]} : vector<9x256xf32> to vector<1x256xf32>
    %13 = vector.broadcast %12 : vector<1x256xf32> to vector<4x256xf32>
    %14 = arith.mulf %11, %13 : vector<4x256xf32>
    %15 = arith.truncf %14 : vector<4x256xf32> to vector<4x256xbf16>
    %c4 = arith.constant 4 : index
    %c0_7 = arith.constant 0 : index
    %16 = vector.load %arg16[%c4, %c0_7] : memref<72x256xbf16, #tpu.memory_space<vmem>>, vector<4x256xbf16>
    tpu.vector_store %arg16[%c4, %c0_7], %15 {strides = array<i32>} : memref<72x256xbf16, #tpu.memory_space<vmem>>, vector<4x256xbf16>,
    %c15_i32 = arith.constant 15 : i32
    %17 = tpu.dynamic_rotate %3 by %c15_i32 dim 1 : vector<4x256xf32>, i32 -> vector<4x256xf32>
    %18 = vector.extract_strided_slice %0 {offsets = [2, 0], sizes = [1, 256], strides = [1, 1]} : vector<9x256xf32> to vector<1x256xf32>
    %19 = vector.broadcast %18 : vector<1x256xf32> to vector<4x256xf32>
    %20 = arith.mulf %17, %19 : vector<4x256xf32>
    %21 = arith.truncf %20 : vector<4x256xf32> to vector<4x256xbf16>
    %c8 = arith.constant 8 : index
    %c0_8 = arith.constant 0 : index
    %22 = vector.load %arg16[%c8, %c0_8] : memref<72x256xbf16, #tpu.memory_space<vmem>>, vector<4x256xbf16>
    tpu.vector_store %arg16[%c8, %c0_8], %21 {strides = array<i32>} : memref<72x256xbf16, #tpu.memory_space<vmem>>, vector<4x256xbf16>,
    %c1_i32 = arith.constant 1 : i32
    %23 = tpu.dynamic_rotate %3 by %c1_i32 dim 1 : vector<4x256xf32>, i32 -> vector<4x256xf32>
    %24 = vector.extract_strided_slice %0 {offsets = [3, 0], sizes = [1, 256], strides = [1, 1]} : vector<9x256xf32> to vector<1x256xf32>
    %25 = vector.broadcast %24 : vector<1x256xf32> to vector<4x256xf32>
    %26 = arith.mulf %23, %25 : vector<4x256xf32>
    %27 = arith.truncf %26 : vector<4x256xf32> to vector<4x256xbf16>
    %c12 = arith.constant 12 : index
    %c0_9 = arith.constant 0 : index
    %28 = vector.load %arg16[%c12, %c0_9] : memref<72x256xbf16, #tpu.memory_space<vmem>>, vector<4x256xbf16>
    tpu.vector_store %arg16[%c12, %c0_9], %27 {strides = array<i32>} : memref<72x256xbf16, #tpu.memory_space<vmem>>, vector<4x256xbf16>,
    %29 = arith.truncf %3 : vector<4x256xf32> to vector<4x256xbf16>
    %c16 = arith.constant 16 : index
    %c0_10 = arith.constant 0 : index
    %30 = vector.load %arg16[%c16, %c0_10] : memref<72x256xbf16, #tpu.memory_space<vmem>>, vector<4x256xbf16>
    tpu.vector_store %arg16[%c16, %c0_10], %29 {strides = array<i32>} : memref<72x256xbf16, #tpu.memory_space<vmem>>, vector<4x256xbf16>,
    %c255_i32 = arith.constant 255 : i32
    %31 = tpu.dynamic_rotate %3 by %c255_i32 dim 1 : vector<4x256xf32>, i32 -> vector<4x256xf32>
    %32 = vector.extract_strided_slice %0 {offsets = [5, 0], sizes = [1, 256], strides = [1, 1]} : vector<9x256xf32> to vector<1x256xf32>
    %33 = vector.broadcast %32 : vector<1x256xf32> to vector<4x256xf32>
    %34 = arith.mulf %31, %33 : vector<4x256xf32>
    %35 = arith.truncf %34 : vector<4x256xf32> to vector<4x256xbf16>
    %c20 = arith.constant 20 : index
    %c0_11 = arith.constant 0 : index
    %36 = vector.load %arg16[%c20, %c0_11] : memref<72x256xbf16, #tpu.memory_space<vmem>>, vector<4x256xbf16>
    tpu.vector_store %arg16[%c20, %c0_11], %35 {strides = array<i32>} : memref<72x256xbf16, #tpu.memory_space<vmem>>, vector<4x256xbf16>,
    %c241_i32 = arith.constant 241 : i32
    %37 = tpu.dynamic_rotate %3 by %c241_i32 dim 1 : vector<4x256xf32>, i32 -> vector<4x256xf32>
    %38 = vector.extract_strided_slice %0 {offsets = [6, 0], sizes = [1, 256], strides = [1, 1]} : vector<9x256xf32> to vector<1x256xf32>
    %39 = vector.broadcast %38 : vector<1x256xf32> to vector<4x256xf32>
    %40 = arith.mulf %37, %39 : vector<4x256xf32>
    %41 = arith.truncf %40 : vector<4x256xf32> to vector<4x256xbf16>
    %c24 = arith.constant 24 : index
    %c0_12 = arith.constant 0 : index
    %42 = vector.load %arg16[%c24, %c0_12] : memref<72x256xbf16, #tpu.memory_space<vmem>>, vector<4x256xbf16>
    tpu.vector_store %arg16[%c24, %c0_12], %41 {strides = array<i32>} : memref<72x256xbf16, #tpu.memory_space<vmem>>, vector<4x256xbf16>,
    %c240_i32 = arith.constant 240 : i32
    %43 = tpu.dynamic_rotate %3 by %c240_i32 dim 1 : vector<4x256xf32>, i32 -> vector<4x256xf32>
    %44 = vector.extract_strided_slice %0 {offsets = [7, 0], sizes = [1, 256], strides = [1, 1]} : vector<9x256xf32> to vector<1x256xf32>
    %45 = vector.broadcast %44 : vector<1x256xf32> to vector<4x256xf32>
    %46 = arith.mulf %43, %45 : vector<4x256xf32>
    %47 = arith.truncf %46 : vector<4x256xf32> to vector<4x256xbf16>
    %c28 = arith.constant 28 : index
    %c0_13 = arith.constant 0 : index
    %48 = vector.load %arg16[%c28, %c0_13] : memref<72x256xbf16, #tpu.memory_space<vmem>>, vector<4x256xbf16>
    tpu.vector_store %arg16[%c28, %c0_13], %47 {strides = array<i32>} : memref<72x256xbf16, #tpu.memory_space<vmem>>, vector<4x256xbf16>,
    %c239_i32 = arith.constant 239 : i32
    %49 = tpu.dynamic_rotate %3 by %c239_i32 dim 1 : vector<4x256xf32>, i32 -> vector<4x256xf32>
    %50 = vector.extract_strided_slice %0 {offsets = [8, 0], sizes = [1, 256], strides = [1, 1]} : vector<9x256xf32> to vector<1x256xf32>
    %51 = vector.broadcast %50 : vector<1x256xf32> to vector<4x256xf32>
    %52 = arith.mulf %49, %51 : vector<4x256xf32>
    %53 = arith.truncf %52 : vector<4x256xf32> to vector<4x256xbf16>
    %c32 = arith.constant 32 : index
    %c0_14 = arith.constant 0 : index
    %54 = vector.load %arg16[%c32, %c0_14] : memref<72x256xbf16, #tpu.memory_space<vmem>>, vector<4x256xbf16>
    tpu.vector_store %arg16[%c32, %c0_14], %53 {strides = array<i32>} : memref<72x256xbf16, #tpu.memory_space<vmem>>, vector<4x256xbf16>,
    %c0_15 = arith.constant 0 : index
    %c0_16 = arith.constant 0 : index
    %55 = vector.load %arg16[%c0_15, %c0_16] : memref<72x256xbf16, #tpu.memory_space<vmem>>, vector<36x256xbf16>
    %cst = arith.constant dense<0.000000e+00> : vector<8x256xf32>
    %56 = tpu.matmul %4, %55, %cst {dimension_numbers = #tpu.dot_dimension_numbers<[1], [0], [0], [1], [0, 0, 1, 1], [], []>} : vector<8x36xbf16>, vector<36x256xbf16>, vector<8x256xf32> -> vector<8x256xf32>
    %c0_17 = arith.constant 0 : index
    %c0_18 = arith.constant 0 : index
    %57 = vector.load %arg4[%c0_17, %c0_18] : memref<8x1xf32, #tpu.memory_space<vmem>>, vector<8x1xf32>
    %58 = vector.broadcast %57 : vector<8x1xf32> to vector<8x256xf32>
    %59 = arith.addf %56, %58 : vector<8x256xf32>
    %cst_19 = arith.constant 0.000000e+00 : f32
    %60 = vector.broadcast %cst_19 : f32 to vector<8x256xf32>
    %61 = arith.cmpf ogt, %59, %60 : vector<8x256xf32>
    %cst_20 = arith.constant 2.000000e-01 : f32
    %62 = vector.broadcast %cst_20 : f32 to vector<8x256xf32>
    %63 = arith.mulf %62, %59 : vector<8x256xf32>
    %64 = arith.select %61, %59, %63 : vector<8x256xi1>, vector<8x256xf32>
    %c0_21 = arith.constant 0 : index
    %c0_22 = arith.constant 0 : index
    %65 = vector.load %arg5[%c0_21, %c0_22] : memref<8x8xbf16, #tpu.memory_space<vmem>>, vector<8x8xbf16>
    %66 = arith.truncf %64 : vector<8x256xf32> to vector<8x256xbf16>
    %cst_23 = arith.constant dense<0.000000e+00> : vector<8x256xf32>
    %67 = tpu.matmul %65, %66, %cst_23 {dimension_numbers = #tpu.dot_dimension_numbers<[1], [0], [0], [1], [0, 0, 1, 1], [], []>} : vector<8x8xbf16>, vector<8x256xbf16>, vector<8x256xf32> -> vector<8x256xf32>
    %c0_24 = arith.constant 0 : index
    %c0_25 = arith.constant 0 : index
    %68 = vector.load %arg6[%c0_24, %c0_25] : memref<8x1xf32, #tpu.memory_space<vmem>>, vector<8x1xf32>
    %69 = vector.broadcast %68 : vector<8x1xf32> to vector<8x256xf32>
    %70 = arith.addf %67, %69 : vector<8x256xf32>
    %cst_26 = arith.constant 0.000000e+00 : f32
    %71 = vector.broadcast %cst_26 : f32 to vector<8x256xf32>
    %72 = arith.cmpf ogt, %70, %71 : vector<8x256xf32>
    %cst_27 = arith.constant 2.000000e-01 : f32
    %73 = vector.broadcast %cst_27 : f32 to vector<8x256xf32>
    %74 = arith.mulf %73, %70 : vector<8x256xf32>
    %75 = arith.select %72, %70, %74 : vector<8x256xi1>, vector<8x256xf32>
    %c0_28 = arith.constant 0 : index
    %c0_29 = arith.constant 0 : index
    %76 = vector.load %arg7[%c0_28, %c0_29] : memref<8x72xbf16, #tpu.memory_space<vmem>>, vector<8x72xbf16>
    %c17_i32_30 = arith.constant 17 : i32
    %77 = tpu.dynamic_rotate %75 by %c17_i32_30 dim 1 : vector<8x256xf32>, i32 -> vector<8x256xf32>
    %78 = vector.extract_strided_slice %0 {offsets = [0, 0], sizes = [1, 256], strides = [1, 1]} : vector<9x256xf32> to vector<1x256xf32>
    %79 = vector.broadcast %78 : vector<1x256xf32> to vector<8x256xf32>
    %80 = arith.mulf %77, %79 : vector<8x256xf32>
    %81 = arith.truncf %80 : vector<8x256xf32> to vector<8x256xbf16>
    %c0_31 = arith.constant 0 : index
    %c0_32 = arith.constant 0 : index
    %82 = vector.load %arg16[%c0_31, %c0_32] : memref<72x256xbf16, #tpu.memory_space<vmem>>, vector<8x256xbf16>
    tpu.vector_store %arg16[%c0_31, %c0_32], %81 {strides = array<i32>} : memref<72x256xbf16, #tpu.memory_space<vmem>>, vector<8x256xbf16>,
    %c16_i32_33 = arith.constant 16 : i32
    %83 = tpu.dynamic_rotate %75 by %c16_i32_33 dim 1 : vector<8x256xf32>, i32 -> vector<8x256xf32>
    %84 = vector.extract_strided_slice %0 {offsets = [1, 0], sizes = [1, 256], strides = [1, 1]} : vector<9x256xf32> to vector<1x256xf32>
    %85 = vector.broadcast %84 : vector<1x256xf32> to vector<8x256xf32>
    %86 = arith.mulf %83, %85 : vector<8x256xf32>
    %87 = arith.truncf %86 : vector<8x256xf32> to vector<8x256xbf16>
    %c8_34 = arith.constant 8 : index
    %c0_35 = arith.constant 0 : index
    %88 = vector.load %arg16[%c8_34, %c0_35] : memref<72x256xbf16, #tpu.memory_space<vmem>>, vector<8x256xbf16>
    tpu.vector_store %arg16[%c8_34, %c0_35], %87 {strides = array<i32>} : memref<72x256xbf16, #tpu.memory_space<vmem>>, vector<8x256xbf16>,
    %c15_i32_36 = arith.constant 15 : i32
    %89 = tpu.dynamic_rotate %75 by %c15_i32_36 dim 1 : vector<8x256xf32>, i32 -> vector<8x256xf32>
    %90 = vector.extract_strided_slice %0 {offsets = [2, 0], sizes = [1, 256], strides = [1, 1]} : vector<9x256xf32> to vector<1x256xf32>
    %91 = vector.broadcast %90 : vector<1x256xf32> to vector<8x256xf32>
    %92 = arith.mulf %89, %91 : vector<8x256xf32>
    %93 = arith.truncf %92 : vector<8x256xf32> to vector<8x256xbf16>
    %c16_37 = arith.constant 16 : index
    %c0_38 = arith.constant 0 : index
    %94 = vector.load %arg16[%c16_37, %c0_38] : memref<72x256xbf16, #tpu.memory_space<vmem>>, vector<8x256xbf16>
    tpu.vector_store %arg16[%c16_37, %c0_38], %93 {strides = array<i32>} : memref<72x256xbf16, #tpu.memory_space<vmem>>, vector<8x256xbf16>,
    %c1_i32_39 = arith.constant 1 : i32
    %95 = tpu.dynamic_rotate %75 by %c1_i32_39 dim 1 : vector<8x256xf32>, i32 -> vector<8x256xf32>
    %96 = vector.extract_strided_slice %0 {offsets = [3, 0], sizes = [1, 256], strides = [1, 1]} : vector<9x256xf32> to vector<1x256xf32>
    %97 = vector.broadcast %96 : vector<1x256xf32> to vector<8x256xf32>
    %98 = arith.mulf %95, %97 : vector<8x256xf32>
    %99 = arith.truncf %98 : vector<8x256xf32> to vector<8x256xbf16>
    %c24_40 = arith.constant 24 : index
    %c0_41 = arith.constant 0 : index
    %100 = vector.load %arg16[%c24_40, %c0_41] : memref<72x256xbf16, #tpu.memory_space<vmem>>, vector<8x256xbf16>
    tpu.vector_store %arg16[%c24_40, %c0_41], %99 {strides = array<i32>} : memref<72x256xbf16, #tpu.memory_space<vmem>>, vector<8x256xbf16>,
    %101 = arith.truncf %75 : vector<8x256xf32> to vector<8x256xbf16>
    %c32_42 = arith.constant 32 : index
    %c0_43 = arith.constant 0 : index
    %102 = vector.load %arg16[%c32_42, %c0_43] : memref<72x256xbf16, #tpu.memory_space<vmem>>, vector<8x256xbf16>
    tpu.vector_store %arg16[%c32_42, %c0_43], %101 {strides = array<i32>} : memref<72x256xbf16, #tpu.memory_space<vmem>>, vector<8x256xbf16>,
    %c255_i32_44 = arith.constant 255 : i32
    %103 = tpu.dynamic_rotate %75 by %c255_i32_44 dim 1 : vector<8x256xf32>, i32 -> vector<8x256xf32>
    %104 = vector.extract_strided_slice %0 {offsets = [5, 0], sizes = [1, 256], strides = [1, 1]} : vector<9x256xf32> to vector<1x256xf32>
    %105 = vector.broadcast %104 : vector<1x256xf32> to vector<8x256xf32>
    %106 = arith.mulf %103, %105 : vector<8x256xf32>
    %107 = arith.truncf %106 : vector<8x256xf32> to vector<8x256xbf16>
    %c40 = arith.constant 40 : index
    %c0_45 = arith.constant 0 : index
    %108 = vector.load %arg16[%c40, %c0_45] : memref<72x256xbf16, #tpu.memory_space<vmem>>, vector<8x256xbf16>
    tpu.vector_store %arg16[%c40, %c0_45], %107 {strides = array<i32>} : memref<72x256xbf16, #tpu.memory_space<vmem>>, vector<8x256xbf16>,
    %c241_i32_46 = arith.constant 241 : i32
    %109 = tpu.dynamic_rotate %75 by %c241_i32_46 dim 1 : vector<8x256xf32>, i32 -> vector<8x256xf32>
    %110 = vector.extract_strided_slice %0 {offsets = [6, 0], sizes = [1, 256], strides = [1, 1]} : vector<9x256xf32> to vector<1x256xf32>
    %111 = vector.broadcast %110 : vector<1x256xf32> to vector<8x256xf32>
    %112 = arith.mulf %109, %111 : vector<8x256xf32>
    %113 = arith.truncf %112 : vector<8x256xf32> to vector<8x256xbf16>
    %c48 = arith.constant 48 : index
    %c0_47 = arith.constant 0 : index
    %114 = vector.load %arg16[%c48, %c0_47] : memref<72x256xbf16, #tpu.memory_space<vmem>>, vector<8x256xbf16>
    tpu.vector_store %arg16[%c48, %c0_47], %113 {strides = array<i32>} : memref<72x256xbf16, #tpu.memory_space<vmem>>, vector<8x256xbf16>,
    %c240_i32_48 = arith.constant 240 : i32
    %115 = tpu.dynamic_rotate %75 by %c240_i32_48 dim 1 : vector<8x256xf32>, i32 -> vector<8x256xf32>
    %116 = vector.extract_strided_slice %0 {offsets = [7, 0], sizes = [1, 256], strides = [1, 1]} : vector<9x256xf32> to vector<1x256xf32>
    %117 = vector.broadcast %116 : vector<1x256xf32> to vector<8x256xf32>
    %118 = arith.mulf %115, %117 : vector<8x256xf32>
    %119 = arith.truncf %118 : vector<8x256xf32> to vector<8x256xbf16>
    %c56 = arith.constant 56 : index
    %c0_49 = arith.constant 0 : index
    %120 = vector.load %arg16[%c56, %c0_49] : memref<72x256xbf16, #tpu.memory_space<vmem>>, vector<8x256xbf16>
    tpu.vector_store %arg16[%c56, %c0_49], %119 {strides = array<i32>} : memref<72x256xbf16, #tpu.memory_space<vmem>>, vector<8x256xbf16>,
    %c239_i32_50 = arith.constant 239 : i32
    %121 = tpu.dynamic_rotate %75 by %c239_i32_50 dim 1 : vector<8x256xf32>, i32 -> vector<8x256xf32>
    %122 = vector.extract_strided_slice %0 {offsets = [8, 0], sizes = [1, 256], strides = [1, 1]} : vector<9x256xf32> to vector<1x256xf32>
    %123 = vector.broadcast %122 : vector<1x256xf32> to vector<8x256xf32>
    %124 = arith.mulf %121, %123 : vector<8x256xf32>
    %125 = arith.truncf %124 : vector<8x256xf32> to vector<8x256xbf16>
    %c64 = arith.constant 64 : index
    %c0_51 = arith.constant 0 : index
    %126 = vector.load %arg16[%c64, %c0_51] : memref<72x256xbf16, #tpu.memory_space<vmem>>, vector<8x256xbf16>
    tpu.vector_store %arg16[%c64, %c0_51], %125 {strides = array<i32>} : memref<72x256xbf16, #tpu.memory_space<vmem>>, vector<8x256xbf16>,
    %c0_52 = arith.constant 0 : index
    %c0_53 = arith.constant 0 : index
    %127 = vector.load %arg16[%c0_52, %c0_53] : memref<72x256xbf16, #tpu.memory_space<vmem>>, vector<72x256xbf16>
    %cst_54 = arith.constant dense<0.000000e+00> : vector<8x256xf32>
    %128 = tpu.matmul %76, %127, %cst_54 {dimension_numbers = #tpu.dot_dimension_numbers<[1], [0], [0], [1], [0, 0, 1, 1], [], []>} : vector<8x72xbf16>, vector<72x256xbf16>, vector<8x256xf32> -> vector<8x256xf32>
    %c0_55 = arith.constant 0 : index
    %c0_56 = arith.constant 0 : index
    %129 = vector.load %arg8[%c0_55, %c0_56] : memref<8x1xf32, #tpu.memory_space<vmem>>, vector<8x1xf32>
    %130 = vector.broadcast %129 : vector<8x1xf32> to vector<8x256xf32>
    %131 = arith.addf %128, %130 : vector<8x256xf32>
    %132 = vector.extract_strided_slice %131 {offsets = [0, 0], sizes = [4, 256], strides = [1, 1]} : vector<8x256xf32> to vector<4x256xf32>
    %cst_57 = arith.constant 5.000000e-01 : f32
    %133 = vector.broadcast %cst_57 : f32 to vector<4x256xf32>
    %134 = arith.mulf %133, %132 : vector<4x256xf32>
    %135 = math.tanh %134 : vector<4x256xf32>
    %cst_58 = arith.constant 1.000000e+00 : f32
    %136 = vector.broadcast %cst_58 : f32 to vector<4x256xf32>
    %137 = arith.mulf %136, %135 : vector<4x256xf32>
    %138 = math.exp %137 : vector<4x256xf32>
    %139 = arith.mulf %2, %138 : vector<4x256xf32>
    %140 = vector.extract_strided_slice %131 {offsets = [4, 0], sizes = [4, 256], strides = [1, 1]} : vector<8x256xf32> to vector<4x256xf32>
    %141 = arith.addf %139, %140 : vector<4x256xf32>
    %c0_59 = arith.constant 0 : index
    %c0_60 = arith.constant 0 : index
    %142 = vector.load %arg9[%c0_59, %c0_60] : memref<8x36xbf16, #tpu.memory_space<vmem>>, vector<8x36xbf16>
    %c17_i32_61 = arith.constant 17 : i32
    %143 = tpu.dynamic_rotate %141 by %c17_i32_61 dim 1 : vector<4x256xf32>, i32 -> vector<4x256xf32>
    %144 = vector.extract_strided_slice %0 {offsets = [0, 0], sizes = [1, 256], strides = [1, 1]} : vector<9x256xf32> to vector<1x256xf32>
    %145 = vector.broadcast %144 : vector<1x256xf32> to vector<4x256xf32>
    %146 = arith.mulf %143, %145 : vector<4x256xf32>
    %147 = arith.truncf %146 : vector<4x256xf32> to vector<4x256xbf16>
    %c0_62 = arith.constant 0 : index
    %c0_63 = arith.constant 0 : index
    %148 = vector.load %arg16[%c0_62, %c0_63] : memref<72x256xbf16, #tpu.memory_space<vmem>>, vector<4x256xbf16>
    tpu.vector_store %arg16[%c0_62, %c0_63], %147 {strides = array<i32>} : memref<72x256xbf16, #tpu.memory_space<vmem>>, vector<4x256xbf16>,
    %c16_i32_64 = arith.constant 16 : i32
    %149 = tpu.dynamic_rotate %141 by %c16_i32_64 dim 1 : vector<4x256xf32>, i32 -> vector<4x256xf32>
    %150 = vector.extract_strided_slice %0 {offsets = [1, 0], sizes = [1, 256], strides = [1, 1]} : vector<9x256xf32> to vector<1x256xf32>
    %151 = vector.broadcast %150 : vector<1x256xf32> to vector<4x256xf32>
    %152 = arith.mulf %149, %151 : vector<4x256xf32>
    %153 = arith.truncf %152 : vector<4x256xf32> to vector<4x256xbf16>
    %c4_65 = arith.constant 4 : index
    %c0_66 = arith.constant 0 : index
    %154 = vector.load %arg16[%c4_65, %c0_66] : memref<72x256xbf16, #tpu.memory_space<vmem>>, vector<4x256xbf16>
    tpu.vector_store %arg16[%c4_65, %c0_66], %153 {strides = array<i32>} : memref<72x256xbf16, #tpu.memory_space<vmem>>, vector<4x256xbf16>,
    %c15_i32_67 = arith.constant 15 : i32
    %155 = tpu.dynamic_rotate %141 by %c15_i32_67 dim 1 : vector<4x256xf32>, i32 -> vector<4x256xf32>
    %156 = vector.extract_strided_slice %0 {offsets = [2, 0], sizes = [1, 256], strides = [1, 1]} : vector<9x256xf32> to vector<1x256xf32>
    %157 = vector.broadcast %156 : vector<1x256xf32> to vector<4x256xf32>
    %158 = arith.mulf %155, %157 : vector<4x256xf32>
    %159 = arith.truncf %158 : vector<4x256xf32> to vector<4x256xbf16>
    %c8_68 = arith.constant 8 : index
    %c0_69 = arith.constant 0 : index
    %160 = vector.load %arg16[%c8_68, %c0_69] : memref<72x256xbf16, #tpu.memory_space<vmem>>, vector<4x256xbf16>
    tpu.vector_store %arg16[%c8_68, %c0_69], %159 {strides = array<i32>} : memref<72x256xbf16, #tpu.memory_space<vmem>>, vector<4x256xbf16>,
    %c1_i32_70 = arith.constant 1 : i32
    %161 = tpu.dynamic_rotate %141 by %c1_i32_70 dim 1 : vector<4x256xf32>, i32 -> vector<4x256xf32>
    %162 = vector.extract_strided_slice %0 {offsets = [3, 0], sizes = [1, 256], strides = [1, 1]} : vector<9x256xf32> to vector<1x256xf32>
    %163 = vector.broadcast %162 : vector<1x256xf32> to vector<4x256xf32>
    %164 = arith.mulf %161, %163 : vector<4x256xf32>
    %165 = arith.truncf %164 : vector<4x256xf32> to vector<4x256xbf16>
    %c12_71 = arith.constant 12 : index
    %c0_72 = arith.constant 0 : index
    %166 = vector.load %arg16[%c12_71, %c0_72] : memref<72x256xbf16, #tpu.memory_space<vmem>>, vector<4x256xbf16>
    tpu.vector_store %arg16[%c12_71, %c0_72], %165 {strides = array<i32>} : memref<72x256xbf16, #tpu.memory_space<vmem>>, vector<4x256xbf16>,
    %167 = arith.truncf %141 : vector<4x256xf32> to vector<4x256xbf16>
    %c16_73 = arith.constant 16 : index
    %c0_74 = arith.constant 0 : index
    %168 = vector.load %arg16[%c16_73, %c0_74] : memref<72x256xbf16, #tpu.memory_space<vmem>>, vector<4x256xbf16>
    tpu.vector_store %arg16[%c16_73, %c0_74], %167 {strides = array<i32>} : memref<72x256xbf16, #tpu.memory_space<vmem>>, vector<4x256xbf16>,
    %c255_i32_75 = arith.constant 255 : i32
    %169 = tpu.dynamic_rotate %141 by %c255_i32_75 dim 1 : vector<4x256xf32>, i32 -> vector<4x256xf32>
    %170 = vector.extract_strided_slice %0 {offsets = [5, 0], sizes = [1, 256], strides = [1, 1]} : vector<9x256xf32> to vector<1x256xf32>
    %171 = vector.broadcast %170 : vector<1x256xf32> to vector<4x256xf32>
    %172 = arith.mulf %169, %171 : vector<4x256xf32>
    %173 = arith.truncf %172 : vector<4x256xf32> to vector<4x256xbf16>
    %c20_76 = arith.constant 20 : index
    %c0_77 = arith.constant 0 : index
    %174 = vector.load %arg16[%c20_76, %c0_77] : memref<72x256xbf16, #tpu.memory_space<vmem>>, vector<4x256xbf16>
    tpu.vector_store %arg16[%c20_76, %c0_77], %173 {strides = array<i32>} : memref<72x256xbf16, #tpu.memory_space<vmem>>, vector<4x256xbf16>,
    %c241_i32_78 = arith.constant 241 : i32
    %175 = tpu.dynamic_rotate %141 by %c241_i32_78 dim 1 : vector<4x256xf32>, i32 -> vector<4x256xf32>
    %176 = vector.extract_strided_slice %0 {offsets = [6, 0], sizes = [1, 256], strides = [1, 1]} : vector<9x256xf32> to vector<1x256xf32>
    %177 = vector.broadcast %176 : vector<1x256xf32> to vector<4x256xf32>
    %178 = arith.mulf %175, %177 : vector<4x256xf32>
    %179 = arith.truncf %178 : vector<4x256xf32> to vector<4x256xbf16>
    %c24_79 = arith.constant 24 : index
    %c0_80 = arith.constant 0 : index
    %180 = vector.load %arg16[%c24_79, %c0_80] : memref<72x256xbf16, #tpu.memory_space<vmem>>, vector<4x256xbf16>
    tpu.vector_store %arg16[%c24_79, %c0_80], %179 {strides = array<i32>} : memref<72x256xbf16, #tpu.memory_space<vmem>>, vector<4x256xbf16>,
    %c240_i32_81 = arith.constant 240 : i32
    %181 = tpu.dynamic_rotate %141 by %c240_i32_81 dim 1 : vector<4x256xf32>, i32 -> vector<4x256xf32>
    %182 = vector.extract_strided_slice %0 {offsets = [7, 0], sizes = [1, 256], strides = [1, 1]} : vector<9x256xf32> to vector<1x256xf32>
    %183 = vector.broadcast %182 : vector<1x256xf32> to vector<4x256xf32>
    %184 = arith.mulf %181, %183 : vector<4x256xf32>
    %185 = arith.truncf %184 : vector<4x256xf32> to vector<4x256xbf16>
    %c28_82 = arith.constant 28 : index
    %c0_83 = arith.constant 0 : index
    %186 = vector.load %arg16[%c28_82, %c0_83] : memref<72x256xbf16, #tpu.memory_space<vmem>>, vector<4x256xbf16>
    tpu.vector_store %arg16[%c28_82, %c0_83], %185 {strides = array<i32>} : memref<72x256xbf16, #tpu.memory_space<vmem>>, vector<4x256xbf16>,
    %c239_i32_84 = arith.constant 239 : i32
    %187 = tpu.dynamic_rotate %141 by %c239_i32_84 dim 1 : vector<4x256xf32>, i32 -> vector<4x256xf32>
    %188 = vector.extract_strided_slice %0 {offsets = [8, 0], sizes = [1, 256], strides = [1, 1]} : vector<9x256xf32> to vector<1x256xf32>
    %189 = vector.broadcast %188 : vector<1x256xf32> to vector<4x256xf32>
    %190 = arith.mulf %187, %189 : vector<4x256xf32>
    %191 = arith.truncf %190 : vector<4x256xf32> to vector<4x256xbf16>
    %c32_85 = arith.constant 32 : index
    %c0_86 = arith.constant 0 : index
    %192 = vector.load %arg16[%c32_85, %c0_86] : memref<72x256xbf16, #tpu.memory_space<vmem>>, vector<4x256xbf16>
    tpu.vector_store %arg16[%c32_85, %c0_86], %191 {strides = array<i32>} : memref<72x256xbf16, #tpu.memory_space<vmem>>, vector<4x256xbf16>,
    %c0_87 = arith.constant 0 : index
    %c0_88 = arith.constant 0 : index
    %193 = vector.load %arg16[%c0_87, %c0_88] : memref<72x256xbf16, #tpu.memory_space<vmem>>, vector<36x256xbf16>
    %cst_89 = arith.constant dense<0.000000e+00> : vector<8x256xf32>
    %194 = tpu.matmul %142, %193, %cst_89 {dimension_numbers = #tpu.dot_dimension_numbers<[1], [0], [0], [1], [0, 0, 1, 1], [], []>} : vector<8x36xbf16>, vector<36x256xbf16>, vector<8x256xf32> -> vector<8x256xf32>
    %c0_90 = arith.constant 0 : index
    %c0_91 = arith.constant 0 : index
    %195 = vector.load %arg10[%c0_90, %c0_91] : memref<8x1xf32, #tpu.memory_space<vmem>>, vector<8x1xf32>
    %196 = vector.broadcast %195 : vector<8x1xf32> to vector<8x256xf32>
    %197 = arith.addf %194, %196 : vector<8x256xf32>
    %cst_92 = arith.constant 0.000000e+00 : f32
    %198 = vector.broadcast %cst_92 : f32 to vector<8x256xf32>
    %199 = arith.cmpf ogt, %197, %198 : vector<8x256xf32>
    %cst_93 = arith.constant 2.000000e-01 : f32
    %200 = vector.broadcast %cst_93 : f32 to vector<8x256xf32>
    %201 = arith.mulf %200, %197 : vector<8x256xf32>
    %202 = arith.select %199, %197, %201 : vector<8x256xi1>, vector<8x256xf32>
    %c0_94 = arith.constant 0 : index
    %c0_95 = arith.constant 0 : index
    %203 = vector.load %arg11[%c0_94, %c0_95] : memref<8x8xbf16, #tpu.memory_space<vmem>>, vector<8x8xbf16>
    %204 = arith.truncf %202 : vector<8x256xf32> to vector<8x256xbf16>
    %cst_96 = arith.constant dense<0.000000e+00> : vector<8x256xf32>
    %205 = tpu.matmul %203, %204, %cst_96 {dimension_numbers = #tpu.dot_dimension_numbers<[1], [0], [0], [1], [0, 0, 1, 1], [], []>} : vector<8x8xbf16>, vector<8x256xbf16>, vector<8x256xf32> -> vector<8x256xf32>
    %c0_97 = arith.constant 0 : index
    %c0_98 = arith.constant 0 : index
    %206 = vector.load %arg12[%c0_97, %c0_98] : memref<8x1xf32, #tpu.memory_space<vmem>>, vector<8x1xf32>
    %207 = vector.broadcast %206 : vector<8x1xf32> to vector<8x256xf32>
    %208 = arith.addf %205, %207 : vector<8x256xf32>
    %cst_99 = arith.constant 0.000000e+00 : f32
    %209 = vector.broadcast %cst_99 : f32 to vector<8x256xf32>
    %210 = arith.cmpf ogt, %208, %209 : vector<8x256xf32>
    %cst_100 = arith.constant 2.000000e-01 : f32
    %211 = vector.broadcast %cst_100 : f32 to vector<8x256xf32>
    %212 = arith.mulf %211, %208 : vector<8x256xf32>
    %213 = arith.select %210, %208, %212 : vector<8x256xi1>, vector<8x256xf32>
    %c0_101 = arith.constant 0 : index
    %c0_102 = arith.constant 0 : index
    %214 = vector.load %arg13[%c0_101, %c0_102] : memref<8x72xbf16, #tpu.memory_space<vmem>>, vector<8x72xbf16>
    %c17_i32_103 = arith.constant 17 : i32
    %215 = tpu.dynamic_rotate %213 by %c17_i32_103 dim 1 : vector<8x256xf32>, i32 -> vector<8x256xf32>
    %216 = vector.extract_strided_slice %0 {offsets = [0, 0], sizes = [1, 256], strides = [1, 1]} : vector<9x256xf32> to vector<1x256xf32>
    %217 = vector.broadcast %216 : vector<1x256xf32> to vector<8x256xf32>
    %218 = arith.mulf %215, %217 : vector<8x256xf32>
    %219 = arith.truncf %218 : vector<8x256xf32> to vector<8x256xbf16>
    %c0_104 = arith.constant 0 : index
    %c0_105 = arith.constant 0 : index
    %220 = vector.load %arg16[%c0_104, %c0_105] : memref<72x256xbf16, #tpu.memory_space<vmem>>, vector<8x256xbf16>
    tpu.vector_store %arg16[%c0_104, %c0_105], %219 {strides = array<i32>} : memref<72x256xbf16, #tpu.memory_space<vmem>>, vector<8x256xbf16>,
    %c16_i32_106 = arith.constant 16 : i32
    %221 = tpu.dynamic_rotate %213 by %c16_i32_106 dim 1 : vector<8x256xf32>, i32 -> vector<8x256xf32>
    %222 = vector.extract_strided_slice %0 {offsets = [1, 0], sizes = [1, 256], strides = [1, 1]} : vector<9x256xf32> to vector<1x256xf32>
    %223 = vector.broadcast %222 : vector<1x256xf32> to vector<8x256xf32>
    %224 = arith.mulf %221, %223 : vector<8x256xf32>
    %225 = arith.truncf %224 : vector<8x256xf32> to vector<8x256xbf16>
    %c8_107 = arith.constant 8 : index
    %c0_108 = arith.constant 0 : index
    %226 = vector.load %arg16[%c8_107, %c0_108] : memref<72x256xbf16, #tpu.memory_space<vmem>>, vector<8x256xbf16>
    tpu.vector_store %arg16[%c8_107, %c0_108], %225 {strides = array<i32>} : memref<72x256xbf16, #tpu.memory_space<vmem>>, vector<8x256xbf16>,
    %c15_i32_109 = arith.constant 15 : i32
    %227 = tpu.dynamic_rotate %213 by %c15_i32_109 dim 1 : vector<8x256xf32>, i32 -> vector<8x256xf32>
    %228 = vector.extract_strided_slice %0 {offsets = [2, 0], sizes = [1, 256], strides = [1, 1]} : vector<9x256xf32> to vector<1x256xf32>
    %229 = vector.broadcast %228 : vector<1x256xf32> to vector<8x256xf32>
    %230 = arith.mulf %227, %229 : vector<8x256xf32>
    %231 = arith.truncf %230 : vector<8x256xf32> to vector<8x256xbf16>
    %c16_110 = arith.constant 16 : index
    %c0_111 = arith.constant 0 : index
    %232 = vector.load %arg16[%c16_110, %c0_111] : memref<72x256xbf16, #tpu.memory_space<vmem>>, vector<8x256xbf16>
    tpu.vector_store %arg16[%c16_110, %c0_111], %231 {strides = array<i32>} : memref<72x256xbf16, #tpu.memory_space<vmem>>, vector<8x256xbf16>,
    %c1_i32_112 = arith.constant 1 : i32
    %233 = tpu.dynamic_rotate %213 by %c1_i32_112 dim 1 : vector<8x256xf32>, i32 -> vector<8x256xf32>
    %234 = vector.extract_strided_slice %0 {offsets = [3, 0], sizes = [1, 256], strides = [1, 1]} : vector<9x256xf32> to vector<1x256xf32>
    %235 = vector.broadcast %234 : vector<1x256xf32> to vector<8x256xf32>
    %236 = arith.mulf %233, %235 : vector<8x256xf32>
    %237 = arith.truncf %236 : vector<8x256xf32> to vector<8x256xbf16>
    %c24_113 = arith.constant 24 : index
    %c0_114 = arith.constant 0 : index
    %238 = vector.load %arg16[%c24_113, %c0_114] : memref<72x256xbf16, #tpu.memory_space<vmem>>, vector<8x256xbf16>
    tpu.vector_store %arg16[%c24_113, %c0_114], %237 {strides = array<i32>} : memref<72x256xbf16, #tpu.memory_space<vmem>>, vector<8x256xbf16>,
    %239 = arith.truncf %213 : vector<8x256xf32> to vector<8x256xbf16>
    %c32_115 = arith.constant 32 : index
    %c0_116 = arith.constant 0 : index
    %240 = vector.load %arg16[%c32_115, %c0_116] : memref<72x256xbf16, #tpu.memory_space<vmem>>, vector<8x256xbf16>
    tpu.vector_store %arg16[%c32_115, %c0_116], %239 {strides = array<i32>} : memref<72x256xbf16, #tpu.memory_space<vmem>>, vector<8x256xbf16>,
    %c255_i32_117 = arith.constant 255 : i32
    %241 = tpu.dynamic_rotate %213 by %c255_i32_117 dim 1 : vector<8x256xf32>, i32 -> vector<8x256xf32>
    %242 = vector.extract_strided_slice %0 {offsets = [5, 0], sizes = [1, 256], strides = [1, 1]} : vector<9x256xf32> to vector<1x256xf32>
    %243 = vector.broadcast %242 : vector<1x256xf32> to vector<8x256xf32>
    %244 = arith.mulf %241, %243 : vector<8x256xf32>
    %245 = arith.truncf %244 : vector<8x256xf32> to vector<8x256xbf16>
    %c40_118 = arith.constant 40 : index
    %c0_119 = arith.constant 0 : index
    %246 = vector.load %arg16[%c40_118, %c0_119] : memref<72x256xbf16, #tpu.memory_space<vmem>>, vector<8x256xbf16>
    tpu.vector_store %arg16[%c40_118, %c0_119], %245 {strides = array<i32>} : memref<72x256xbf16, #tpu.memory_space<vmem>>, vector<8x256xbf16>,
    %c241_i32_120 = arith.constant 241 : i32
    %247 = tpu.dynamic_rotate %213 by %c241_i32_120 dim 1 : vector<8x256xf32>, i32 -> vector<8x256xf32>
    %248 = vector.extract_strided_slice %0 {offsets = [6, 0], sizes = [1, 256], strides = [1, 1]} : vector<9x256xf32> to vector<1x256xf32>
    %249 = vector.broadcast %248 : vector<1x256xf32> to vector<8x256xf32>
    %250 = arith.mulf %247, %249 : vector<8x256xf32>
    %251 = arith.truncf %250 : vector<8x256xf32> to vector<8x256xbf16>
    %c48_121 = arith.constant 48 : index
    %c0_122 = arith.constant 0 : index
    %252 = vector.load %arg16[%c48_121, %c0_122] : memref<72x256xbf16, #tpu.memory_space<vmem>>, vector<8x256xbf16>
    tpu.vector_store %arg16[%c48_121, %c0_122], %251 {strides = array<i32>} : memref<72x256xbf16, #tpu.memory_space<vmem>>, vector<8x256xbf16>,
    %c240_i32_123 = arith.constant 240 : i32
    %253 = tpu.dynamic_rotate %213 by %c240_i32_123 dim 1 : vector<8x256xf32>, i32 -> vector<8x256xf32>
    %254 = vector.extract_strided_slice %0 {offsets = [7, 0], sizes = [1, 256], strides = [1, 1]} : vector<9x256xf32> to vector<1x256xf32>
    %255 = vector.broadcast %254 : vector<1x256xf32> to vector<8x256xf32>
    %256 = arith.mulf %253, %255 : vector<8x256xf32>
    %257 = arith.truncf %256 : vector<8x256xf32> to vector<8x256xbf16>
    %c56_124 = arith.constant 56 : index
    %c0_125 = arith.constant 0 : index
    %258 = vector.load %arg16[%c56_124, %c0_125] : memref<72x256xbf16, #tpu.memory_space<vmem>>, vector<8x256xbf16>
    tpu.vector_store %arg16[%c56_124, %c0_125], %257 {strides = array<i32>} : memref<72x256xbf16, #tpu.memory_space<vmem>>, vector<8x256xbf16>,
    %c239_i32_126 = arith.constant 239 : i32
    %259 = tpu.dynamic_rotate %213 by %c239_i32_126 dim 1 : vector<8x256xf32>, i32 -> vector<8x256xf32>
    %260 = vector.extract_strided_slice %0 {offsets = [8, 0], sizes = [1, 256], strides = [1, 1]} : vector<9x256xf32> to vector<1x256xf32>
    %261 = vector.broadcast %260 : vector<1x256xf32> to vector<8x256xf32>
    %262 = arith.mulf %259, %261 : vector<8x256xf32>
    %263 = arith.truncf %262 : vector<8x256xf32> to vector<8x256xbf16>
    %c64_127 = arith.constant 64 : index
    %c0_128 = arith.constant 0 : index
    %264 = vector.load %arg16[%c64_127, %c0_128] : memref<72x256xbf16, #tpu.memory_space<vmem>>, vector<8x256xbf16>
    tpu.vector_store %arg16[%c64_127, %c0_128], %263 {strides = array<i32>} : memref<72x256xbf16, #tpu.memory_space<vmem>>, vector<8x256xbf16>,
    %c0_129 = arith.constant 0 : index
    %c0_130 = arith.constant 0 : index
    %265 = vector.load %arg16[%c0_129, %c0_130] : memref<72x256xbf16, #tpu.memory_space<vmem>>, vector<72x256xbf16>
    %cst_131 = arith.constant dense<0.000000e+00> : vector<8x256xf32>
    %266 = tpu.matmul %214, %265, %cst_131 {dimension_numbers = #tpu.dot_dimension_numbers<[1], [0], [0], [1], [0, 0, 1, 1], [], []>} : vector<8x72xbf16>, vector<72x256xbf16>, vector<8x256xf32> -> vector<8x256xf32>
    %c0_132 = arith.constant 0 : index
    %c0_133 = arith.constant 0 : index
    %267 = vector.load %arg14[%c0_132, %c0_133] : memref<8x1xf32, #tpu.memory_space<vmem>>, vector<8x1xf32>
    %268 = vector.broadcast %267 : vector<8x1xf32> to vector<8x256xf32>
    %269 = arith.addf %266, %268 : vector<8x256xf32>
    %270 = vector.extract_strided_slice %269 {offsets = [0, 0], sizes = [4, 256], strides = [1, 1]} : vector<8x256xf32> to vector<4x256xf32>
    %cst_134 = arith.constant 5.000000e-01 : f32
    %271 = vector.broadcast %cst_134 : f32 to vector<4x256xf32>
    %272 = arith.mulf %271, %270 : vector<4x256xf32>
    %273 = math.tanh %272 : vector<4x256xf32>
    %cst_135 = arith.constant 1.000000e+00 : f32
    %274 = vector.broadcast %cst_135 : f32 to vector<4x256xf32>
    %275 = arith.mulf %274, %273 : vector<4x256xf32>
    %276 = math.exp %275 : vector<4x256xf32>
    %277 = arith.mulf %3, %276 : vector<4x256xf32>
    %278 = vector.extract_strided_slice %269 {offsets = [4, 0], sizes = [4, 256], strides = [1, 1]} : vector<8x256xf32> to vector<4x256xf32>
    %279 = arith.addf %277, %278 : vector<4x256xf32>
    %280 = tpu.concatenate %141, %279 in 0 : vector<4x256xf32>, vector<4x256xf32> -> vector<8x256xf32>
    %c0_136 = arith.constant 0 : index
    %c0_137 = arith.constant 0 : index
    %281 = vector.load %arg15[%c0_136, %c0_137] : memref<8x256xf32, #tpu.memory_space<vmem>>, vector<8x256xf32>
    tpu.vector_store %arg15[%c0_136, %c0_137], %280 {strides = array<i32>} : memref<8x256xf32, #tpu.memory_space<vmem>>, vector<8x256xf32>,
    return
  }
  func.func @transform_0(%arg0: i32) -> (i32, i32) {
    %c0_i32 = arith.constant 0 : i32
    %c0_i32_0 = arith.constant 0 : i32
    return %c0_i32, %arg0 : i32, i32
  }
  func.func @transform_1(%arg0: i32) -> (i32, i32) {
    %c0_i32 = arith.constant 0 : i32
    %c0_i32_0 = arith.constant 0 : i32
    %c0_i32_1 = arith.constant 0 : i32
    return %c0_i32, %c0_i32_0 : i32, i32
  }
  func.func @transform_2(%arg0: i32) -> (i32, i32) {
    %c0_i32 = arith.constant 0 : i32
    %c0_i32_0 = arith.constant 0 : i32
    %c0_i32_1 = arith.constant 0 : i32
    return %c0_i32, %c0_i32_0 : i32, i32
  }
  func.func @transform_3(%arg0: i32) -> (i32, i32) {
    %c0_i32 = arith.constant 0 : i32
    %c0_i32_0 = arith.constant 0 : i32
    %c0_i32_1 = arith.constant 0 : i32
    return %c0_i32, %c0_i32_0 : i32, i32
  }
  func.func @transform_4(%arg0: i32) -> (i32, i32) {
    %c0_i32 = arith.constant 0 : i32
    %c0_i32_0 = arith.constant 0 : i32
    %c0_i32_1 = arith.constant 0 : i32
    return %c0_i32, %c0_i32_0 : i32, i32
  }
  func.func @transform_5(%arg0: i32) -> (i32, i32) {
    %c0_i32 = arith.constant 0 : i32
    %c0_i32_0 = arith.constant 0 : i32
    %c0_i32_1 = arith.constant 0 : i32
    return %c0_i32, %c0_i32_0 : i32, i32
  }
  func.func @transform_6(%arg0: i32) -> (i32, i32) {
    %c0_i32 = arith.constant 0 : i32
    %c0_i32_0 = arith.constant 0 : i32
    %c0_i32_1 = arith.constant 0 : i32
    return %c0_i32, %c0_i32_0 : i32, i32
  }
  func.func @transform_7(%arg0: i32) -> (i32, i32) {
    %c0_i32 = arith.constant 0 : i32
    %c0_i32_0 = arith.constant 0 : i32
    %c0_i32_1 = arith.constant 0 : i32
    return %c0_i32, %c0_i32_0 : i32, i32
  }
  func.func @transform_8(%arg0: i32) -> (i32, i32) {
    %c0_i32 = arith.constant 0 : i32
    %c0_i32_0 = arith.constant 0 : i32
    %c0_i32_1 = arith.constant 0 : i32
    return %c0_i32, %c0_i32_0 : i32, i32
  }
  func.func @transform_9(%arg0: i32) -> (i32, i32) {
    %c0_i32 = arith.constant 0 : i32
    %c0_i32_0 = arith.constant 0 : i32
    %c0_i32_1 = arith.constant 0 : i32
    return %c0_i32, %c0_i32_0 : i32, i32
  }
  func.func @transform_10(%arg0: i32) -> (i32, i32) {
    %c0_i32 = arith.constant 0 : i32
    %c0_i32_0 = arith.constant 0 : i32
    %c0_i32_1 = arith.constant 0 : i32
    return %c0_i32, %c0_i32_0 : i32, i32
  }
  func.func @transform_11(%arg0: i32) -> (i32, i32) {
    %c0_i32 = arith.constant 0 : i32
    %c0_i32_0 = arith.constant 0 : i32
    %c0_i32_1 = arith.constant 0 : i32
    return %c0_i32, %c0_i32_0 : i32, i32
  }
  func.func @transform_12(%arg0: i32) -> (i32, i32) {
    %c0_i32 = arith.constant 0 : i32
    %c0_i32_0 = arith.constant 0 : i32
    %c0_i32_1 = arith.constant 0 : i32
    return %c0_i32, %c0_i32_0 : i32, i32
  }
  func.func @transform_13(%arg0: i32) -> (i32, i32) {
    %c0_i32 = arith.constant 0 : i32
    %c0_i32_0 = arith.constant 0 : i32
    %c0_i32_1 = arith.constant 0 : i32
    return %c0_i32, %c0_i32_0 : i32, i32
  }
  func.func @transform_14(%arg0: i32) -> (i32, i32) {
    %c0_i32 = arith.constant 0 : i32
    %c0_i32_0 = arith.constant 0 : i32
    return %c0_i32, %arg0 : i32, i32
  }
}

</mosaic_0001>

<llo_original>
// kernel: tpu_custom_call.1
$region0: #{tpu_custom_call.1}
  #allocation0 [shape = 'u32[]', space=smem, size = 0x4, offset = 0x4, fixed_abs, tag = 'smem constant byte address 0x4 - core index']
  #allocation1 [shape = 'u32[144,128]{1,0:T(1,128)}', space=vmem, size = 0x12000, scoped, tag = 'internal scratch']
  #allocation2 [shape = 'bf16[72,256]{1,0:T(8,128)(2,1)}', space=vmem, size = 0x9000, scoped, tag = 'scratch operand']
  %s0 = inlined_call_operand.vmem [shape: f32[8,512], index: 0, kind: input, shape index: {}]
  %s1 = inlined_call_operand.hbm [shape: f32[9,256], index: 1, kind: input, shape index: {}]
  %s2 = inlined_call_operand.vmem [shape: bf16[8,36], index: 2, kind: input, shape index: {}]
  %s3 = inlined_call_operand.vmem [shape: f32[8,1], index: 3, kind: input, shape index: {}]
  %s4 = inlined_call_operand.vmem [shape: bf16[8,8], index: 4, kind: input, shape index: {}]
  %s5 = inlined_call_operand.vmem [shape: f32[8,1], index: 5, kind: input, shape index: {}]
  %s6 = inlined_call_operand.vmem [shape: bf16[8,72], index: 6, kind: input, shape index: {}]
  %s7 = inlined_call_operand.vmem [shape: f32[8,1], index: 7, kind: input, shape index: {}]
  %s8 = inlined_call_operand.vmem [shape: bf16[8,36], index: 8, kind: input, shape index: {}]
  %s9 = inlined_call_operand.vmem [shape: f32[8,1], index: 9, kind: input, shape index: {}]
  %s10 = inlined_call_operand.vmem [shape: bf16[8,8], index: 10, kind: input, shape index: {}]
  %s11 = inlined_call_operand.vmem [shape: f32[8,1], index: 11, kind: input, shape index: {}]
  %s12 = inlined_call_operand.vmem [shape: bf16[8,72], index: 12, kind: input, shape index: {}]
  %s13 = inlined_call_operand.vmem [shape: f32[8,1], index: 13, kind: input, shape index: {}]
  %s14 = inlined_call_operand.hbm [shape: f32[8,512], index: 14, kind: output, shape index: {}]
  %s15 = sld [smem:[#allocation0]]
  $region93: #{tpu_custom_call.1} parent=0
    _
  %s17 = ssub.s32 1, %s15
  %s18 = scalar_select 0, %s17, %s15
  $region1: #{tpu_custom_call.1} parent=0
    #allocation3 [shape = 'u8[16384]{0}', space=vmem, size = 0x4000, scoped, tag = 'input window, operand 1, single buffered']
    #allocation4 [shape = 's32[2]{0}', space=sflag, size = 0x8, scoped, tag = 'scoped memory for tpu_custom_call.1']
    #allocation5 [shape = 's32[2]{0}', space=sflag, size = 0x8, scoped, tag = 'scoped memory for tpu_custom_call.1']
    #allocation6 [shape = 'u8[16384]{0}', space=vmem, size = 0x4000, scoped, tag = 'output window, operand 0']
    %19 = vsyncpa [#allocation4], 0
    %20 = vsyncpa [#allocation5], 0
    %s21 = scalar_lea.sflag [#allocation5], 1
    %22 = vsyncpa %s21, 0
    loop: start=0, step=1, limit=4
    $region2: #{tpu_custom_call.1} parent=1 // loop_pre_header
      _
    $region3: #{tpu_custom_call.1} parent=1 // loop_header
      %s24 = sphi 0, %s28
      %p25 = scmp.ge.s32.totalorder %s24, 4
      %s34 = sphi 0, %s36
      %s37 = sphi 0, %s34
      %s38 = sphi 0, %s37
      %s54 = sphi 0, %s38
      %s58 = sphi 0, %s58
      %s60 = sphi 0, %s58
      %s61 = sphi 0, %s60
      %s75 = sphi 0, %s61
      %s79 = sphi 0, %s79
      %s81 = sphi 0, %s79
      %s82 = sphi 0, %s81
      %s96 = sphi 0, %s82
      %s100 = sphi 0, %s100
      %s102 = sphi 0, %s100
      %s103 = sphi 0, %s102
      %s117 = sphi 0, %s103
      %s121 = sphi 0, %s121
      %s123 = sphi 0, %s121
      %s124 = sphi 0, %s123
      %s138 = sphi 0, %s124
      %s142 = sphi 0, %s142
      %s144 = sphi 0, %s142
      %s145 = sphi 0, %s144
      %s159 = sphi 0, %s145
      %s163 = sphi 0, %s163
      %s165 = sphi 0, %s163
      %s166 = sphi 0, %s165
      %s180 = sphi 0, %s166
      %s184 = sphi 0, %s184
      %s186 = sphi 0, %s184
      %s187 = sphi 0, %s186
      %s201 = sphi 0, %s187
      %s205 = sphi 0, %s205
      %s207 = sphi 0, %s205
      %s208 = sphi 0, %s207
      %s222 = sphi 0, %s208
      %s226 = sphi 0, %s226
      %s228 = sphi 0, %s226
      %s229 = sphi 0, %s228
      %s243 = sphi 0, %s229
      %s247 = sphi 0, %s247
      %s249 = sphi 0, %s247
      %s250 = sphi 0, %s249
      %s264 = sphi 0, %s250
      %s268 = sphi 0, %s268
      %s270 = sphi 0, %s268
      %s271 = sphi 0, %s270
      %s285 = sphi 0, %s271
      %s289 = sphi 0, %s289
      %s291 = sphi 0, %s289
      %s292 = sphi 0, %s291
      %s306 = sphi 0, %s292
      %s310 = sphi 0, %s310
      %s312 = sphi 0, %s310
      %s313 = sphi 0, %s312
      %s327 = sphi 0, %s313
      %s333 = sphi 0, %s335
      %s336 = sphi 0, %s333
      %s337 = sphi 0, %s336
      %s353 = sphi 0, %s337
    $region4: #{tpu_custom_call.1} parent=1 // loop_header_branch
      %27 = sbr.rel (%p25) target = $region8
    $region5: #{tpu_custom_call.1} parent=1 // loop_body
      %s29 = ssub.s32 %s24, 1
      %s30 = ssub.s32 %s24, 2
      %s31 = sadd.s32 %s24, 1
      %s32 = ssub.s32 %s24, %s31
      %p33 = scmp.eq.s32.totalorder %s32, 0
      %s35 = sadd.s32 %s34, 1
      %s36 = scalar_select %p33, %s34, %s35
      %p39 = pneg %p33
      %p40 = scmp.eq.s32.totalorder %s24, 1
      %p41 = por %p39, %p40
      %p42 = scmp.ne.s32.totalorder %s34, %s37
      %p43 = scmp.eq.s32.totalorder %s24, 0
      %p44 = por %p42, %p43
      %p45 = scmp.ne.s32.totalorder %s34, %s37
      %p46 = scmp.eq.s32.totalorder %s29, 1
      %p47 = por %p45, %p46
      %p48 = scmp.ne.s32.totalorder %s37, %s38
      %p49 = scmp.eq.s32.totalorder %s29, 0
      %p50 = por %p48, %p49
      %p51 = scmp.ne.s32.totalorder %s37, %s38
      %p52 = scmp.eq.s32.totalorder %s30, 1
      %p53 = por %p51, %p52
      %p55 = scmp.ne.s32.totalorder %s38, %s54
      %p56 = scmp.eq.s32.totalorder %s30, 0
      %p57 = por %p55, %p56
      %s59 = sadd.s32 %s58, 1
      %p62 = scmp.eq.s32.totalorder %s24, 1
      %p63 = scmp.ne.s32.totalorder %s58, %s60
      %p64 = scmp.eq.s32.totalorder %s24, 0
      %p65 = por %p63, %p64
      %p66 = scmp.ne.s32.totalorder %s58, %s60
      %p67 = scmp.eq.s32.totalorder %s29, 1
      %p68 = por %p66, %p67
      %p69 = scmp.ne.s32.totalorder %s60, %s61
      %p70 = scmp.eq.s32.totalorder %s29, 0
      %p71 = por %p69, %p70
      %p72 = scmp.ne.s32.totalorder %s60, %s61
      %p73 = scmp.eq.s32.totalorder %s30, 1
      %p74 = por %p72, %p73
      %p76 = scmp.ne.s32.totalorder %s61, %s75
      %p77 = scmp.eq.s32.totalorder %s30, 0
      %p78 = por %p76, %p77
      %s80 = sadd.s32 %s79, 1
      %p83 = scmp.eq.s32.totalorder %s24, 1
      %p84 = scmp.ne.s32.totalorder %s79, %s81
      %p85 = scmp.eq.s32.totalorder %s24, 0
      %p86 = por %p84, %p85
      %p87 = scmp.ne.s32.totalorder %s79, %s81
      %p88 = scmp.eq.s32.totalorder %s29, 1
      %p89 = por %p87, %p88
      %p90 = scmp.ne.s32.totalorder %s81, %s82
      %p91 = scmp.eq.s32.totalorder %s29, 0
      %p92 = por %p90, %p91
      %p93 = scmp.ne.s32.totalorder %s81, %s82
      %p94 = scmp.eq.s32.totalorder %s30, 1
      %p95 = por %p93, %p94
      %p97 = scmp.ne.s32.totalorder %s82, %s96
      %p98 = scmp.eq.s32.totalorder %s30, 0
      %p99 = por %p97, %p98
      %s101 = sadd.s32 %s100, 1
      %p104 = scmp.eq.s32.totalorder %s24, 1
      %p105 = scmp.ne.s32.totalorder %s100, %s102
      %p106 = scmp.eq.s32.totalorder %s24, 0
      %p107 = por %p105, %p106
      %p108 = scmp.ne.s32.totalorder %s100, %s102
      %p109 = scmp.eq.s32.totalorder %s29, 1
      %p110 = por %p108, %p109
      %p111 = scmp.ne.s32.totalorder %s102, %s103
      %p112 = scmp.eq.s32.totalorder %s29, 0
      %p113 = por %p111, %p112
      %p114 = scmp.ne.s32.totalorder %s102, %s103
      %p115 = scmp.eq.s32.totalorder %s30, 1
      %p116 = por %p114, %p115
      %p118 = scmp.ne.s32.totalorder %s103, %s117
      %p119 = scmp.eq.s32.totalorder %s30, 0
      %p120 = por %p118, %p119
      %s122 = sadd.s32 %s121, 1
      %p125 = scmp.eq.s32.totalorder %s24, 1
      %p126 = scmp.ne.s32.totalorder %s121, %s123
      %p127 = scmp.eq.s32.totalorder %s24, 0
      %p128 = por %p126, %p127
      %p129 = scmp.ne.s32.totalorder %s121, %s123
      %p130 = scmp.eq.s32.totalorder %s29, 1
      %p131 = por %p129, %p130
      %p132 = scmp.ne.s32.totalorder %s123, %s124
      %p133 = scmp.eq.s32.totalorder %s29, 0
      %p134 = por %p132, %p133
      %p135 = scmp.ne.s32.totalorder %s123, %s124
      %p136 = scmp.eq.s32.totalorder %s30, 1
      %p137 = por %p135, %p136
      %p139 = scmp.ne.s32.totalorder %s124, %s138
      %p140 = scmp.eq.s32.totalorder %s30, 0
      %p141 = por %p139, %p140
      %s143 = sadd.s32 %s142, 1
      %p146 = scmp.eq.s32.totalorder %s24, 1
      %p147 = scmp.ne.s32.totalorder %s142, %s144
      %p148 = scmp.eq.s32.totalorder %s24, 0
      %p149 = por %p147, %p148
      %p150 = scmp.ne.s32.totalorder %s142, %s144
      %p151 = scmp.eq.s32.totalorder %s29, 1
      %p152 = por %p150, %p151
      %p153 = scmp.ne.s32.totalorder %s144, %s145
      %p154 = scmp.eq.s32.totalorder %s29, 0
      %p155 = por %p153, %p154
      %p156 = scmp.ne.s32.totalorder %s144, %s145
      %p157 = scmp.eq.s32.totalorder %s30, 1
      %p158 = por %p156, %p157
      %p160 = scmp.ne.s32.totalorder %s145, %s159
      %p161 = scmp.eq.s32.totalorder %s30, 0
      %p162 = por %p160, %p161
      %s164 = sadd.s32 %s163, 1
      %p167 = scmp.eq.s32.totalorder %s24, 1
      %p168 = scmp.ne.s32.totalorder %s163, %s165
      %p169 = scmp.eq.s32.totalorder %s24, 0
      %p170 = por %p168, %p169
      %p171 = scmp.ne.s32.totalorder %s163, %s165
      %p172 = scmp.eq.s32.totalorder %s29, 1
      %p173 = por %p171, %p172
      %p174 = scmp.ne.s32.totalorder %s165, %s166
      %p175 = scmp.eq.s32.totalorder %s29, 0
      %p176 = por %p174, %p175
      %p177 = scmp.ne.s32.totalorder %s165, %s166
      %p178 = scmp.eq.s32.totalorder %s30, 1
      %p179 = por %p177, %p178
      %p181 = scmp.ne.s32.totalorder %s166, %s180
      %p182 = scmp.eq.s32.totalorder %s30, 0
      %p183 = por %p181, %p182
      %s185 = sadd.s32 %s184, 1
      %p188 = scmp.eq.s32.totalorder %s24, 1
      %p189 = scmp.ne.s32.totalorder %s184, %s186
      %p190 = scmp.eq.s32.totalorder %s24, 0
      %p191 = por %p189, %p190
      %p192 = scmp.ne.s32.totalorder %s184, %s186
      %p193 = scmp.eq.s32.totalorder %s29, 1
      %p194 = por %p192, %p193
      %p195 = scmp.ne.s32.totalorder %s186, %s187
      %p196 = scmp.eq.s32.totalorder %s29, 0
      %p197 = por %p195, %p196
      %p198 = scmp.ne.s32.totalorder %s186, %s187
      %p199 = scmp.eq.s32.totalorder %s30, 1
      %p200 = por %p198, %p199
      %p202 = scmp.ne.s32.totalorder %s187, %s201
      %p203 = scmp.eq.s32.totalorder %s30, 0
      %p204 = por %p202, %p203
      %s206 = sadd.s32 %s205, 1
      %p209 = scmp.eq.s32.totalorder %s24, 1
      %p210 = scmp.ne.s32.totalorder %s205, %s207
      %p211 = scmp.eq.s32.totalorder %s24, 0
      %p212 = por %p210, %p211
      %p213 = scmp.ne.s32.totalorder %s205, %s207
      %p214 = scmp.eq.s32.totalorder %s29, 1
      %p215 = por %p213, %p214
      %p216 = scmp.ne.s32.totalorder %s207, %s208
      %p217 = scmp.eq.s32.totalorder %s29, 0
      %p218 = por %p216, %p217
      %p219 = scmp.ne.s32.totalorder %s207, %s208
      %p220 = scmp.eq.s32.totalorder %s30, 1
      %p221 = por %p219, %p220
      %p223 = scmp.ne.s32.totalorder %s208, %s222
      %p224 = scmp.eq.s32.totalorder %s30, 0
      %p225 = por %p223, %p224
      %s227 = sadd.s32 %s226, 1
      %p230 = scmp.eq.s32.totalorder %s24, 1
      %p231 = scmp.ne.s32.totalorder %s226, %s228
      %p232 = scmp.eq.s32.totalorder %s24, 0
      %p233 = por %p231, %p232
      %p234 = scmp.ne.s32.totalorder %s226, %s228
      %p235 = scmp.eq.s32.totalorder %s29, 1
      %p236 = por %p234, %p235
      %p237 = scmp.ne.s32.totalorder %s228, %s229
      %p238 = scmp.eq.s32.totalorder %s29, 0
      %p239 = por %p237, %p238
      %p240 = scmp.ne.s32.totalorder %s228, %s229
      %p241 = scmp.eq.s32.totalorder %s30, 1
      %p242 = por %p240, %p241
      %p244 = scmp.ne.s32.totalorder %s229, %s243
      %p245 = scmp.eq.s32.totalorder %s30, 0
      %p246 = por %p244, %p245
      %s248 = sadd.s32 %s247, 1
      %p251 = scmp.eq.s32.totalorder %s24, 1
      %p252 = scmp.ne.s32.totalorder %s247, %s249
      %p253 = scmp.eq.s32.totalorder %s24, 0
      %p254 = por %p252, %p253
      %p255 = scmp.ne.s32.totalorder %s247, %s249
      %p256 = scmp.eq.s32.totalorder %s29, 1
      %p257 = por %p255, %p256
      %p258 = scmp.ne.s32.totalorder %s249, %s250
      %p259 = scmp.eq.s32.totalorder %s29, 0
      %p260 = por %p258, %p259
      %p261 = scmp.ne.s32.totalorder %s249, %s250
      %p262 = scmp.eq.s32.totalorder %s30, 1
      %p263 = por %p261, %p262
      %p265 = scmp.ne.s32.totalorder %s250, %s264
      %p266 = scmp.eq.s32.totalorder %s30, 0
      %p267 = por %p265, %p266
      %s269 = sadd.s32 %s268, 1
      %p272 = scmp.eq.s32.totalorder %s24, 1
      %p273 = scmp.ne.s32.totalorder %s268, %s270
      %p274 = scmp.eq.s32.totalorder %s24, 0
      %p275 = por %p273, %p274
      %p276 = scmp.ne.s32.totalorder %s268, %s270
      %p277 = scmp.eq.s32.totalorder %s29, 1
      %p278 = por %p276, %p277
      %p279 = scmp.ne.s32.totalorder %s270, %s271
      %p280 = scmp.eq.s32.totalorder %s29, 0
      %p281 = por %p279, %p280
      %p282 = scmp.ne.s32.totalorder %s270, %s271
      %p283 = scmp.eq.s32.totalorder %s30, 1
      %p284 = por %p282, %p283
      %p286 = scmp.ne.s32.totalorder %s271, %s285
      %p287 = scmp.eq.s32.totalorder %s30, 0
      %p288 = por %p286, %p287
      %s290 = sadd.s32 %s289, 1
      %p293 = scmp.eq.s32.totalorder %s24, 1
      %p294 = scmp.ne.s32.totalorder %s289, %s291
      %p295 = scmp.eq.s32.totalorder %s24, 0
      %p296 = por %p294, %p295
      %p297 = scmp.ne.s32.totalorder %s289, %s291
      %p298 = scmp.eq.s32.totalorder %s29, 1
      %p299 = por %p297, %p298
      %p300 = scmp.ne.s32.totalorder %s291, %s292
      %p301 = scmp.eq.s32.totalorder %s29, 0
      %p302 = por %p300, %p301
      %p303 = scmp.ne.s32.totalorder %s291, %s292
      %p304 = scmp.eq.s32.totalorder %s30, 1
      %p305 = por %p303, %p304
      %p307 = scmp.ne.s32.totalorder %s292, %s306
      %p308 = scmp.eq.s32.totalorder %s30, 0
      %p309 = por %p307, %p308
      %s311 = sadd.s32 %s310, 1
      %p314 = scmp.eq.s32.totalorder %s24, 1
      %p315 = scmp.ne.s32.totalorder %s310, %s312
      %p316 = scmp.eq.s32.totalorder %s24, 0
      %p317 = por %p315, %p316
      %p318 = scmp.ne.s32.totalorder %s310, %s312
      %p319 = scmp.eq.s32.totalorder %s29, 1
      %p320 = por %p318, %p319
      %p321 = scmp.ne.s32.totalorder %s312, %s313
      %p322 = scmp.eq.s32.totalorder %s29, 0
      %p323 = por %p321, %p322
      %p324 = scmp.ne.s32.totalorder %s312, %s313
      %p325 = scmp.eq.s32.totalorder %s30, 1
      %p326 = por %p324, %p325
      %p328 = scmp.ne.s32.totalorder %s313, %s327
      %p329 = scmp.eq.s32.totalorder %s30, 0
      %p330 = por %p328, %p329
      %s331 = ssub.s32 %s24, %s31
      %p332 = scmp.eq.s32.totalorder %s331, 0
      %s334 = sadd.s32 %s333, 1
      %s335 = scalar_select %p332, %s333, %s334
      %p338 = pneg %p332
      %p339 = scmp.eq.s32.totalorder %s24, 1
      %p340 = por %p338, %p339
      %p341 = scmp.ne.s32.totalorder %s333, %s336
      %p342 = scmp.eq.s32.totalorder %s24, 0
      %p343 = por %p341, %p342
      %p344 = scmp.ne.s32.totalorder %s333, %s336
      %p345 = scmp.eq.s32.totalorder %s29, 1
      %p346 = por %p344, %p345
      %p347 = scmp.ne.s32.totalorder %s336, %s337
      %p348 = scmp.eq.s32.totalorder %s29, 0
      %p349 = por %p347, %p348
      %p350 = scmp.ne.s32.totalorder %s336, %s337
      %p351 = scmp.eq.s32.totalorder %s30, 1
      %p352 = por %p350, %p351
      %p354 = scmp.ne.s32.totalorder %s337, %s353
      %p355 = scmp.eq.s32.totalorder %s30, 0
      %p356 = por %p354, %p355
      %p357 = scmp.le.s32.totalorder 1, %s24
      %p358 = scmp.lt.s32.totalorder %s24, 3
      %p359 = pnand %p357, %p358
      %p360 = pneg %p359
      // Predicated region
      $region9: #{tpu_custom_call.1} parent=5 // pred_check
        _
      $region10: #{tpu_custom_call.1} parent=5 // pred_check_branch
        %362 = sbr.rel (%p359) target = $region12
      $region11: #{tpu_custom_call.1} parent=5 // pred_region
        %s363 = ssub.s32 %s24, 1
        // Predicated region
        $region13: #{tpu_custom_call.1} parent=11 // pred_check
          %p364 = pneg %p71
        $region14: #{tpu_custom_call.1} parent=11 // pred_check_branch
          %366 = sbr.rel (%p364) target = $region16
        $region15: #{tpu_custom_call.1} parent=11 // pred_region
          %s368 = ssub.s32 512, 512
          %369 = vsyncadd [#allocation4], %s368
          %s370 = sshll.u32 [#allocation3], 4
          %s371 = int_to_ptr.vmem [resolvable:$true] %s370
          %376 = dma.hbm_to_vmem [thread:$0]  %s1, 512, %s371, [#allocation4], 256, 256, 16
        $region16: #{tpu_custom_call.1} parent=11 // pred_fallthru
          _
        // Predicated region
        $region17: #{tpu_custom_call.1} parent=11 // pred_check
          %p377 = pneg %p92
        $region18: #{tpu_custom_call.1} parent=11 // pred_check_branch
          %379 = sbr.rel (%p377) target = $region20
        $region19: #{tpu_custom_call.1} parent=11 // pred_region
          _
        $region20: #{tpu_custom_call.1} parent=11 // pred_fallthru
          _
        // Predicated region
        $region21: #{tpu_custom_call.1} parent=11 // pred_check
          %p380 = pneg %p113
        $region22: #{tpu_custom_call.1} parent=11 // pred_check_branch
          %382 = sbr.rel (%p380) target = $region24
        $region23: #{tpu_custom_call.1} parent=11 // pred_region
          _
        $region24: #{tpu_custom_call.1} parent=11 // pred_fallthru
          _
        // Predicated region
        $region25: #{tpu_custom_call.1} parent=11 // pred_check
          %p383 = pneg %p134
        $region26: #{tpu_custom_call.1} parent=11 // pred_check_branch
          %385 = sbr.rel (%p383) target = $region28
        $region27: #{tpu_custom_call.1} parent=11 // pred_region
          _
        $region28: #{tpu_custom_call.1} parent=11 // pred_fallthru
          _
        // Predicated region
        $region29: #{tpu_custom_call.1} parent=11 // pred_check
          %p386 = pneg %p155
        $region30: #{tpu_custom_call.1} parent=11 // pred_check_branch
          %388 = sbr.rel (%p386) target = $region32
        $region31: #{tpu_custom_call.1} parent=11 // pred_region
          _
        $region32: #{tpu_custom_call.1} parent=11 // pred_fallthru
          _
        // Predicated region
        $region33: #{tpu_custom_call.1} parent=11 // pred_check
          %p389 = pneg %p176
        $region34: #{tpu_custom_call.1} parent=11 // pred_check_branch
          %391 = sbr.rel (%p389) target = $region36
        $region35: #{tpu_custom_call.1} parent=11 // pred_region
          _
        $region36: #{tpu_custom_call.1} parent=11 // pred_fallthru
          _
        // Predicated region
        $region37: #{tpu_custom_call.1} parent=11 // pred_check
          %p392 = pneg %p197
        $region38: #{tpu_custom_call.1} parent=11 // pred_check_branch
          %394 = sbr.rel (%p392) target = $region40
        $region39: #{tpu_custom_call.1} parent=11 // pred_region
          _
        $region40: #{tpu_custom_call.1} parent=11 // pred_fallthru
          _
        // Predicated region
        $region41: #{tpu_custom_call.1} parent=11 // pred_check
          %p395 = pneg %p218
        $region42: #{tpu_custom_call.1} parent=11 // pred_check_branch
          %397 = sbr.rel (%p395) target = $region44
        $region43: #{tpu_custom_call.1} parent=11 // pred_region
          _
        $region44: #{tpu_custom_call.1} parent=11 // pred_fallthru
          _
        // Predicated region
        $region45: #{tpu_custom_call.1} parent=11 // pred_check
          %p398 = pneg %p239
        $region46: #{tpu_custom_call.1} parent=11 // pred_check_branch
          %400 = sbr.rel (%p398) target = $region48
        $region47: #{tpu_custom_call.1} parent=11 // pred_region
          _
        $region48: #{tpu_custom_call.1} parent=11 // pred_fallthru
          _
        // Predicated region
        $region49: #{tpu_custom_call.1} parent=11 // pred_check
          %p401 = pneg %p260
        $region50: #{tpu_custom_call.1} parent=11 // pred_check_branch
          %403 = sbr.rel (%p401) target = $region52
        $region51: #{tpu_custom_call.1} parent=11 // pred_region
          _
        $region52: #{tpu_custom_call.1} parent=11 // pred_fallthru
          _
        // Predicated region
        $region53: #{tpu_custom_call.1} parent=11 // pred_check
          %p404 = pneg %p281
        $region54: #{tpu_custom_call.1} parent=11 // pred_check_branch
          %406 = sbr.rel (%p404) target = $region56
        $region55: #{tpu_custom_call.1} parent=11 // pred_region
          _
        $region56: #{tpu_custom_call.1} parent=11 // pred_fallthru
          _
        // Predicated region
        $region57: #{tpu_custom_call.1} parent=11 // pred_check
          %p407 = pneg %p302
        $region58: #{tpu_custom_call.1} parent=11 // pred_check_branch
          %409 = sbr.rel (%p407) target = $region60
        $region59: #{tpu_custom_call.1} parent=11 // pred_region
          _
        $region60: #{tpu_custom_call.1} parent=11 // pred_fallthru
          _
        // Predicated region
        $region61: #{tpu_custom_call.1} parent=11 // pred_check
          %p410 = pneg %p323
        $region62: #{tpu_custom_call.1} parent=11 // pred_check_branch
          %412 = sbr.rel (%p410) target = $region64
        $region63: #{tpu_custom_call.1} parent=11 // pred_region
          _
        $region64: #{tpu_custom_call.1} parent=11 // pred_fallthru
          _
      $region12: #{tpu_custom_call.1} parent=5 // pred_fallthru
        _
      %p413 = scmp.lt.s32.totalorder %s24, 2
      // Predicated region
      $region65: #{tpu_custom_call.1} parent=5 // pred_check
        %p414 = pneg %p413
      $region66: #{tpu_custom_call.1} parent=5 // pred_check_branch
        %416 = sbr.rel (%p414) target = $region68
      $region67: #{tpu_custom_call.1} parent=5 // pred_region
        // Predicated region
        $region69: #{tpu_custom_call.1} parent=67 // pred_check
          %p417 = pneg %p44
        $region70: #{tpu_custom_call.1} parent=67 // pred_check_branch
          %419 = sbr.rel (%p417) target = $region72
        $region71: #{tpu_custom_call.1} parent=67 // pred_region
          %s420 = smul.u32 2, %s24
          %p421 = scmp.lt.s32.totalorder %s420, 3
          %s422 = scalar_select %p421, %s420, 3
          %s423 = smul.addr %s422, 8
          %s424 = scalar_lea.vmem %s0, %s423
          %s425 = smul.u32 2, %s24
        $region72: #{tpu_custom_call.1} parent=67 // pred_fallthru
          _
      $region68: #{tpu_custom_call.1} parent=5 // pred_fallthru
        _
      %p426 = scmp.le.s32.totalorder 1, %s24
      %p427 = scmp.lt.s32.totalorder %s24, 3
      %p428 = pnand %p426, %p427
      %p429 = pneg %p428
      // Predicated region
      $region73: #{tpu_custom_call.1} parent=5 // pred_check
        _
      $region74: #{tpu_custom_call.1} parent=5 // pred_check_branch
        %431 = sbr.rel (%p428) target = $region76
      $region75: #{tpu_custom_call.1} parent=5 // pred_region
        %s432 = ssub.s32 %s24, 1
        // Predicated region
        $region77: #{tpu_custom_call.1} parent=75 // pred_check
          %p433 = pneg %p71
        $region78: #{tpu_custom_call.1} parent=75 // pred_check_branch
          %435 = sbr.rel (%p433) target = $region80
        $region79: #{tpu_custom_call.1} parent=75 // pred_region
          %436 = dma.done [#allocation4], 512
        $region80: #{tpu_custom_call.1} parent=75 // pred_fallthru
          _
        %s437 = smul.u32 2, %s29
        %p438 = scmp.lt.s32.totalorder %s437, 3
        %s439 = scalar_select %p438, %s437, 3
        %s440 = smul.addr %s439, 8
        %s441 = scalar_lea.vmem %s0, %s440
        %p442 = pneg %p50
        %p443 = pneg %p47
        %p444 = pneg %p71
        %p445 = pneg %p68
        %p446 = pneg %p92
        %p447 = pneg %p89
        %p448 = pneg %p113
        %p449 = pneg %p110
        %p450 = pneg %p134
        %p451 = pneg %p131
        %p452 = pneg %p155
        %p453 = pneg %p152
        %p454 = pneg %p176
        %p455 = pneg %p173
        %p456 = pneg %p197
        %p457 = pneg %p194
        %p458 = pneg %p218
        %p459 = pneg %p215
        %p460 = pneg %p239
        %p461 = pneg %p236
        %p462 = pneg %p260
        %p463 = pneg %p257
        %p464 = pneg %p281
        %p465 = pneg %p278
        %p466 = pneg %p302
        %p467 = pneg %p299
        %p468 = pneg %p323
        %p469 = pneg %p320
        %p470 = pneg %p349
        %p471 = pneg %p346
        %s472 = sand.u32 %s336, 1
        %s473 = scalar_lea.sflag [#allocation5], %s472
        %s474 = sand.u32 %s336, 1
        %s475 = smul.addr %s474, 16
        %s476 = scalar_lea.vmem [#allocation6], %s475
        %s477 = smul.u32 2, %s29
        %p478 = scmp.lt.s32.totalorder %s477, 3
        %s479 = scalar_select %p478, %s477, 3
        %s480 = smul.addr %s479, 8
        %s481 = scalar_lea.vmem %s0, %s480
        %s482 = smul.u32 2, %s29
        %s483 = smul.u32 2, %s29
        %v485 = vld [vmem:[#allocation3] sm:$0xff]
        %v486 = vld [vmem:[#allocation3 + $0x8] sm:$0xff]
        %v487 = vld [vmem:[#allocation3 + $0x10] sm:$0x1]
        %v488 = vld [vmem:[#allocation3 + $0x18] sm:$0x1]
        %v489 = vld [vmem:[%s481] sm:$0xff]
        %v490 = vld [vmem:[%s481 + $0x8] sm:$0xff]
        %v491 = vld [vmem:[%s2] sm:$0xf]
        %v494 = vrot.slane %v489, 4
        %v495 = vrot.slane %v490, 4
        %498 = vrot.lane.b32.xlu0 %v494, 17
        %v499 = vpop.permute.xlu0 %498
        %500 = vrot.lane.b32.xlu0 %v495, 17
        %v501 = vpop.permute.xlu0 %500
        %v502 = vlaneseq
        %v503 = vand.u32 %v502, 127
        %vm504 = vcmp.lt.s32.totalorder %v503, 17
        %v505 = vsel %vm504, %v499, %v501
        %v506 = vsel %vm504, %v501, %v499
        %v507 = vlaneseq
        %v508 = vshrl.u32 %v507, 7
        %v509 = vsub.s32 0, %v508
        %v510 = vrot.slane %v485, %v509
        %v511 = vlaneseq
        %v512 = vshrl.u32 %v511, 7
        %v513 = vsub.s32 0, %v512
        %v514 = vrot.slane %v486, %v513
        %v515 = vmul.f32 %v506, %v510
        %v516 = vmul.f32 %v505, %v514
        %v517 = vpack.c.bf16 %v515, %v515
        %v518 = vpack.c.bf16 %v516, %v516
        %v521 = vunpack.c.l.b16 %v517
        %v522 = vunpack.c.l.b16 %v518
        %v523 = vpack.c.b16 %v522, %v521
        %525 = vst [vmem:[#allocation2] sm:$0x33] %v523
        %526 = vrot.lane.b32.xlu0 %v494, 16
        %v527 = vpop.permute.xlu0 %526
        %528 = vrot.lane.b32.xlu0 %v495, 16
        %v529 = vpop.permute.xlu0 %528
        %vm530 = vcmp.lt.s32.totalorder %v503, 16
        %v531 = vsel %vm530, %v527, %v529
        %v532 = vsel %vm530, %v529, %v527
        %v533 = vlaneseq
        %v534 = vshrl.u32 %v533, 7
        %v535 = vsub.s32 1, %v534
        %v536 = vrot.slane %v485, %v535
        %v537 = vlaneseq
        %v538 = vshrl.u32 %v537, 7
        %v539 = vsub.s32 1, %v538
        %v540 = vrot.slane %v486, %v539
        %v541 = vmul.f32 %v532, %v536
        %v542 = vmul.f32 %v531, %v540
        %v543 = vpack.c.bf16 %v541, %v541
        %v544 = vpack.c.bf16 %v542, %v542
        %v547 = vunpack.c.l.b16 %v543
        %v548 = vunpack.c.l.b16 %v544
        %v549 = vpack.c.b16 %v548, %v547
        %v550 = vrot.slane %v549, 6
        %552 = vst [vmem:[#allocation2] sm:$0xcc] %v550
        %553 = vrot.lane.b32.xlu0 %v494, 15
        %v554 = vpop.permute.xlu0 %553
        %555 = vrot.lane.b32.xlu0 %v495, 15
        %v556 = vpop.permute.xlu0 %555
        %vm557 = vcmp.lt.s32.totalorder %v503, 15
        %v558 = vsel %vm557, %v554, %v556
        %v559 = vsel %vm557, %v556, %v554
        %v560 = vlaneseq
        %v561 = vshrl.u32 %v560, 7
        %v562 = vsub.s32 2, %v561
        %v563 = vrot.slane %v485, %v562
        %v564 = vlaneseq
        %v565 = vshrl.u32 %v564, 7
        %v566 = vsub.s32 2, %v565
        %v567 = vrot.slane %v486, %v566
        %v568 = vmul.f32 %v559, %v563
        %v569 = vmul.f32 %v558, %v567
        %v570 = vpack.c.bf16 %v568, %v568
        %v571 = vpack.c.bf16 %v569, %v569
        %v574 = vunpack.c.l.b16 %v570
        %v575 = vunpack.c.l.b16 %v571
        %v576 = vpack.c.b16 %v575, %v574
        %578 = vst [vmem:[#allocation2 + $0x8] sm:$0x33] %v576
        %579 = vrot.lane.b32.xlu0 %v494, 1
        %v580 = vpop.permute.xlu0 %579
        %581 = vrot.lane.b32.xlu0 %v495, 1
        %v582 = vpop.permute.xlu0 %581
        %vm583 = vcmp.lt.s32.totalorder %v503, 1
        %v584 = vsel %vm583, %v580, %v582
        %v585 = vsel %vm583, %v582, %v580
        %v586 = vlaneseq
        %v587 = vshrl.u32 %v586, 7
        %v588 = vsub.s32 3, %v587
        %v589 = vrot.slane %v485, %v588
        %v590 = vlaneseq
        %v591 = vshrl.u32 %v590, 7
        %v592 = vsub.s32 3, %v591
        %v593 = vrot.slane %v486, %v592
        %v594 = vmul.f32 %v585, %v589
        %v595 = vmul.f32 %v584, %v593
        %v596 = vpack.c.bf16 %v594, %v594
        %v597 = vpack.c.bf16 %v595, %v595
        %v600 = vunpack.c.l.b16 %v596
        %v601 = vunpack.c.l.b16 %v597
        %v602 = vpack.c.b16 %v601, %v600
        %v603 = vrot.slane %v602, 6
        %605 = vst [vmem:[#allocation2 + $0x8] sm:$0xcc] %v603
        %v606 = vpack.c.bf16 %v489, %v489
        %v607 = vpack.c.bf16 %v490, %v490
        %v610 = vunpack.c.l.b16 %v606
        %v611 = vunpack.c.l.b16 %v607
        %v612 = vpack.c.b16 %v611, %v610
        %v613 = vrot.slane %v612, 6
        %v614 = vrot.slane %v613, 4
        %616 = vst [vmem:[#allocation2 + $0x10] sm:$0x33] %v614
        %617 = vrot.lane.b32.xlu0 %v494, 127
        %v618 = vpop.permute.xlu0 %617
        %619 = vrot.lane.b32.xlu0 %v495, 127
        %v620 = vpop.permute.xlu0 %619
        %vm621 = vcmp.lt.s32.totalorder %v503, 127
        %v622 = vsel %vm621, %v618, %v620
        %v623 = vsel %vm621, %v620, %v618
        %v624 = vlaneseq
        %v625 = vshrl.u32 %v624, 7
        %v626 = vsub.s32 5, %v625
        %v627 = vrot.slane %v485, %v626
        %v628 = vlaneseq
        %v629 = vshrl.u32 %v628, 7
        %v630 = vsub.s32 5, %v629
        %v631 = vrot.slane %v486, %v630
        %v632 = vmul.f32 %v622, %v627
        %v633 = vmul.f32 %v623, %v631
        %v634 = vpack.c.bf16 %v632, %v632
        %v635 = vpack.c.bf16 %v633, %v633
        %v638 = vunpack.c.l.b16 %v634
        %v639 = vunpack.c.l.b16 %v635
        %v640 = vpack.c.b16 %v639, %v638
        %v641 = vrot.slane %v640, 6
        %643 = vst [vmem:[#allocation2 + $0x10] sm:$0xcc] %v641
        %644 = vrot.lane.b32.xlu0 %v494, 113
        %v645 = vpop.permute.xlu0 %644
        %646 = vrot.lane.b32.xlu0 %v495, 113
        %v647 = vpop.permute.xlu0 %646
        %vm648 = vcmp.lt.s32.totalorder %v503, 113
        %v649 = vsel %vm648, %v645, %v647
        %v650 = vsel %vm648, %v647, %v645
        %v651 = vlaneseq
        %v652 = vshrl.u32 %v651, 7
        %v653 = vsub.s32 6, %v652
        %v654 = vrot.slane %v485, %v653
        %v655 = vlaneseq
        %v656 = vshrl.u32 %v655, 7
        %v657 = vsub.s32 6, %v656
        %v658 = vrot.slane %v486, %v657
        %v659 = vmul.f32 %v649, %v654
        %v660 = vmul.f32 %v650, %v658
        %v661 = vpack.c.bf16 %v659, %v659
        %v662 = vpack.c.bf16 %v660, %v660
        %v665 = vunpack.c.l.b16 %v661
        %v666 = vunpack.c.l.b16 %v662
        %v667 = vpack.c.b16 %v666, %v665
        %669 = vst [vmem:[#allocation2 + $0x18] sm:$0x33] %v667
        %670 = vrot.lane.b32.xlu0 %v494, 112
        %v671 = vpop.permute.xlu0 %670
        %672 = vrot.lane.b32.xlu0 %v495, 112
        %v673 = vpop.permute.xlu0 %672
        %vm674 = vcmp.lt.s32.totalorder %v503, 112
        %v675 = vsel %vm674, %v671, %v673
        %v676 = vsel %vm674, %v673, %v671
        %v677 = vlaneseq
        %v678 = vshrl.u32 %v677, 7
        %v679 = vsub.s32 7, %v678
        %v680 = vrot.slane %v485, %v679
        %v681 = vlaneseq
        %v682 = vshrl.u32 %v681, 7
        %v683 = vsub.s32 7, %v682
        %v684 = vrot.slane %v486, %v683
        %v685 = vmul.f32 %v675, %v680
        %v686 = vmul.f32 %v676, %v684
        %v687 = vpack.c.bf16 %v685, %v685
        %v688 = vpack.c.bf16 %v686, %v686
        %v691 = vunpack.c.l.b16 %v687
        %v692 = vunpack.c.l.b16 %v688
        %v693 = vpack.c.b16 %v692, %v691
        %v694 = vrot.slane %v693, 6
        %696 = vst [vmem:[#allocation2 + $0x18] sm:$0xcc] %v694
        %697 = vrot.lane.b32.xlu0 %v494, 111
        %v698 = vpop.permute.xlu0 %697
        %699 = vrot.lane.b32.xlu0 %v495, 111
        %v700 = vpop.permute.xlu0 %699
        %vm701 = vcmp.lt.s32.totalorder %v503, 111
        %v702 = vsel %vm701, %v698, %v700
        %v703 = vsel %vm701, %v700, %v698
        %v704 = vlaneseq
        %v705 = vshrl.u32 %v704, 7
        %v706 = vsub.s32 0, %v705
        %v707 = vrot.slane %v487, %v706
        %v708 = vlaneseq
        %v709 = vshrl.u32 %v708, 7
        %v710 = vsub.s32 0, %v709
        %v711 = vrot.slane %v488, %v710
        %v712 = vmul.f32 %v702, %v707
        %v713 = vmul.f32 %v703, %v711
        %v714 = vpack.c.bf16 %v712, %v712
        %v715 = vpack.c.bf16 %v713, %v713
        %v718 = vunpack.c.l.b16 %v714
        %v719 = vunpack.c.l.b16 %v715
        %v720 = vpack.c.b16 %v719, %v718
        %722 = vst [vmem:[#allocation2 + $0x20] sm:$0x33] %v720
        %v723 = vld [vmem:[#allocation2] sm:$0xff]
        %v724 = vld [vmem:[#allocation2 + $0x8] sm:$0xff]
        %v725 = vld [vmem:[#allocation2 + $0x10] sm:$0xff]
        %v726 = vld [vmem:[#allocation2 + $0x18] sm:$0xff]
        %v727 = vld [vmem:[#allocation2 + $0x20] sm:$0x33]
        %v728 = vld [vmem:[%s3] sm:$0xff]
        %730 = vset.pattern.permute.xlu0 0
        %731 = vperm.xlu0 %730, %v728
        %v732 = vpop.permute.xlu0 %731
        %v739 = vunpack.c.l.b16 %v723
        %v740 = vunpack.c.h.b16 %v723
        %v741 = vunpack.c.l.b16 %v724
        %v742 = vunpack.c.h.b16 %v724
        %v743 = vunpack.c.l.b16 %v725
        %v744 = vunpack.c.h.b16 %v725
        %v745 = vunpack.c.l.b16 %v726
        %v746 = vunpack.c.h.b16 %v726
        %v747 = vunpack.c.l.b16 %v727
        %v748 = vunpack.c.h.b16 %v727
        %v749 = vpack.c.b16 %v741, %v739
        %v750 = vpack.c.b16 %v742, %v740
        %v751 = vpack.c.b16 %v745, %v743
        %v752 = vpack.c.b16 %v746, %v744
        %v753 = vpack.c.b16 %v747, %v747
        %v754 = vpack.c.b16 %v748, %v748
        %vm759 = vcmask 293888
        %v761 = vsel %vm759, %v491, 0
        %vm763 = vcmask 1041408
        %v765 = vsel %vm763, %v753, 0
        %v768 = vsel %vm763, %v754, 0
        %770 = vmatprep.subr.bf16.mxu0 0
        %771 = vmatpush1.bf16.msra.mxu0 0
        %772 = vmatprep.subr.bf16.mxu0 0
        %773 = vmatpush1.bf16.msra.mxu0 0
        %774 = vmatprep.subr.bf16.mxu0 0
        %775 = vmatpush1.bf16.msra.mxu0 0
        %776 = vmatprep.subr.bf16.mxu0 0
        %777 = vmatpush1.bf16.msra.mxu0 0
        %778 = vmatprep.subr.bf16.mxu0 0
        %779 = vmatpush1.bf16.msra.mxu0 0
        %780 = vmatprep.subr.bf16.mxu0 %v768
        %781 = vmatpush1.bf16.msra.mxu0 %v765
        %782 = vmatprep.subr.bf16.mxu0 %v752
        %783 = vmatpush1.bf16.msra.mxu0 %v751
        %784 = vmatprep.subr.bf16.mxu0 %v750
        %785 = vmatpush1.bf16.msra.mxu0 %v749
        %786 = vmatprep.subr.bf16.mxu0 0
        %787 = vmatpush2.bf16.msra.mxu0 0
        %788 = vmatprep.subr.bf16.mxu0 0
        %789 = vmatpush2.bf16.msra.mxu0 0
        %790 = vmatprep.subr.bf16.mxu0 0
        %791 = vmatpush2.bf16.msra.mxu0 0
        %792 = vmatprep.subr.bf16.mxu0 0
        %793 = vmatpush2.bf16.msra.mxu0 0
        %794 = vmatprep.subr.bf16.mxu0 0
        %795 = vmatpush2.bf16.msra.mxu0 0
        %796 = vmatprep.subr.bf16.mxu0 0
        %797 = vmatpush2.bf16.msra.mxu0 0
        %798 = vmatprep.subr.bf16.mxu0 0
        %799 = vmatpush2.bf16.msra.mxu0 0
        %800 = vmatprep.subr.bf16.mxu0 0
        %801 = vmatpush2.bf16.msra.mxu0 0
        %802 = vmatprep.mubr.bf16.mxu0 0
        %803 = vmatmul.mubr.bf16.gmra.mxu0 %v761
        %v804 = vpop.f32.mrf.mxu0
        %v805 = vadd.f32 %v732, %v804
        %v806 = vpop.f32.mrf.mxu0
        %v807 = vadd.f32 %v732, %v806
        %v808 = vpop.f32.mrf.mxu0
        %v809 = vpop.f32.mrf.mxu0
        %810 = vdwg.mxu0
        %vm811 = vcmp.gt.f32.partialorder %v805, 0.0
        %vm812 = vcmp.gt.f32.partialorder %v807, 0.0
        %v813 = vmul.f32 %v805, 0.2
        %v814 = vmul.f32 %v807, 0.2
        %v815 = vsel %vm811, %v805, %v813
        %v816 = vsel %vm812, %v807, %v814
        %v817 = vld [vmem:[%s4] sm:$0xf]
        %v818 = vpack.c.bf16 %v815, %v815
        %v819 = vpack.c.bf16 %v816, %v816
        %v820 = vld [vmem:[%s5] sm:$0xff]
        %822 = vset.pattern.permute.xlu0 0
        %823 = vperm.xlu0 %822, %v820
        %v824 = vpop.permute.xlu0 %823
        %vm826 = vcmask 64512
        %v828 = vsel %vm826, %v817, 0
        %vm830 = vcmask 1043456
        %v832 = vsel %vm830, %v818, 0
        %v835 = vsel %vm830, %v819, 0
        %837 = vmatprep.subr.bf16.mxu0 0
        %838 = vmatpush1.bf16.msra.mxu0 0
        %839 = vmatprep.subr.bf16.mxu0 0
        %840 = vmatpush1.bf16.msra.mxu0 0
        %841 = vmatprep.subr.bf16.mxu0 0
        %842 = vmatpush1.bf16.msra.mxu0 0
        %843 = vmatprep.subr.bf16.mxu0 0
        %844 = vmatpush1.bf16.msra.mxu0 0
        %845 = vmatprep.subr.bf16.mxu0 0
        %846 = vmatpush1.bf16.msra.mxu0 0
        %847 = vmatprep.subr.bf16.mxu0 0
        %848 = vmatpush1.bf16.msra.mxu0 0
        %849 = vmatprep.subr.bf16.mxu0 0
        %850 = vmatpush1.bf16.msra.mxu0 0
        %851 = vmatprep.subr.bf16.mxu0 %v835
        %852 = vmatpush1.bf16.msra.mxu0 %v832
        %853 = vmatprep.subr.bf16.mxu0 0
        %854 = vmatpush2.bf16.msra.mxu0 0
        %855 = vmatprep.subr.bf16.mxu0 0
        %856 = vmatpush2.bf16.msra.mxu0 0
        %857 = vmatprep.subr.bf16.mxu0 0
        %858 = vmatpush2.bf16.msra.mxu0 0
        %859 = vmatprep.subr.bf16.mxu0 0
        %860 = vmatpush2.bf16.msra.mxu0 0
        %861 = vmatprep.subr.bf16.mxu0 0
        %862 = vmatpush2.bf16.msra.mxu0 0
        %863 = vmatprep.subr.bf16.mxu0 0
        %864 = vmatpush2.bf16.msra.mxu0 0
        %865 = vmatprep.subr.bf16.mxu0 0
        %866 = vmatpush2.bf16.msra.mxu0 0
        %867 = vmatprep.subr.bf16.mxu0 0
        %868 = vmatpush2.bf16.msra.mxu0 0
        %869 = vmatprep.mubr.bf16.mxu0 0
        %870 = vmatmul.mubr.bf16.gmra.mxu0 %v828
        %v871 = vpop.f32.mrf.mxu0
        %v872 = vadd.f32 %v824, %v871
        %v873 = vpop.f32.mrf.mxu0
        %v874 = vadd.f32 %v824, %v873
        %v875 = vpop.f32.mrf.mxu0
        %v876 = vpop.f32.mrf.mxu0
        %877 = vdwg.mxu0
        %vm878 = vcmp.gt.f32.partialorder %v872, 0.0
        %vm879 = vcmp.gt.f32.partialorder %v874, 0.0
        %v880 = vmul.f32 %v872, 0.2
        %v881 = vmul.f32 %v874, 0.2
        %v882 = vsel %vm878, %v872, %v880
        %v883 = vsel %vm879, %v874, %v881
        %v884 = vld [vmem:[%s6] sm:$0xf]
        %885 = vrot.lane.b32.xlu0 %v882, 17
        %v886 = vpop.permute.xlu0 %885
        %887 = vrot.lane.b32.xlu0 %v883, 17
        %v888 = vpop.permute.xlu0 %887
        %v889 = vsel %vm504, %v886, %v888
        %v890 = vsel %vm504, %v888, %v886
        %v891 = vmul.f32 %v890, %v510
        %v892 = vmul.f32 %v889, %v514
        %v893 = vpack.c.bf16 %v891, %v891
        %v894 = vpack.c.bf16 %v892, %v892
        %v897 = vunpack.c.l.b16 %v893
        %v898 = vunpack.c.l.b16 %v894
        %v899 = vpack.c.b16 %v898, %v897
        %901 = vst [vmem:[#allocation2] sm:$0xff] %v899
        %902 = vrot.lane.b32.xlu0 %v882, 16
        %v903 = vpop.permute.xlu0 %902
        %904 = vrot.lane.b32.xlu0 %v883, 16
        %v905 = vpop.permute.xlu0 %904
        %v906 = vsel %vm530, %v903, %v905
        %v907 = vsel %vm530, %v905, %v903
        %v908 = vmul.f32 %v907, %v536
        %v909 = vmul.f32 %v906, %v540
        %v910 = vpack.c.bf16 %v908, %v908
        %v911 = vpack.c.bf16 %v909, %v909
        %v914 = vunpack.c.l.b16 %v910
        %v915 = vunpack.c.l.b16 %v911
        %v916 = vpack.c.b16 %v915, %v914
        %918 = vst [vmem:[#allocation2 + $0x8] sm:$0xff] %v916
        %919 = vrot.lane.b32.xlu0 %v882, 15
        %v920 = vpop.permute.xlu0 %919
        %921 = vrot.lane.b32.xlu0 %v883, 15
        %v922 = vpop.permute.xlu0 %921
        %v923 = vsel %vm557, %v920, %v922
        %v924 = vsel %vm557, %v922, %v920
        %v925 = vmul.f32 %v924, %v563
        %v926 = vmul.f32 %v923, %v567
        %v927 = vpack.c.bf16 %v925, %v925
        %v928 = vpack.c.bf16 %v926, %v926
        %v931 = vunpack.c.l.b16 %v927
        %v932 = vunpack.c.l.b16 %v928
        %v933 = vpack.c.b16 %v932, %v931
        %935 = vst [vmem:[#allocation2 + $0x10] sm:$0xff] %v933
        %936 = vrot.lane.b32.xlu0 %v882, 1
        %v937 = vpop.permute.xlu0 %936
        %938 = vrot.lane.b32.xlu0 %v883, 1
        %v939 = vpop.permute.xlu0 %938
        %v940 = vsel %vm583, %v937, %v939
        %v941 = vsel %vm583, %v939, %v937
        %v942 = vmul.f32 %v941, %v589
        %v943 = vmul.f32 %v940, %v593
        %v944 = vpack.c.bf16 %v942, %v942
        %v945 = vpack.c.bf16 %v943, %v943
        %v948 = vunpack.c.l.b16 %v944
        %v949 = vunpack.c.l.b16 %v945
        %v950 = vpack.c.b16 %v949, %v948
        %952 = vst [vmem:[#allocation2 + $0x18] sm:$0xff] %v950
        %v953 = vpack.c.bf16 %v882, %v882
        %v954 = vpack.c.bf16 %v883, %v883
        %v957 = vunpack.c.l.b16 %v953
        %v958 = vunpack.c.l.b16 %v954
        %v959 = vpack.c.b16 %v958, %v957
        %961 = vst [vmem:[#allocation2 + $0x20] sm:$0xff] %v959
        %962 = vrot.lane.b32.xlu0 %v882, 127
        %v963 = vpop.permute.xlu0 %962
        %964 = vrot.lane.b32.xlu0 %v883, 127
        %v965 = vpop.permute.xlu0 %964
        %v966 = vsel %vm621, %v963, %v965
        %v967 = vsel %vm621, %v965, %v963
        %v968 = vmul.f32 %v966, %v627
        %v969 = vmul.f32 %v967, %v631
        %v970 = vpack.c.bf16 %v968, %v968
        %v971 = vpack.c.bf16 %v969, %v969
        %v974 = vunpack.c.l.b16 %v970
        %v975 = vunpack.c.l.b16 %v971
        %v976 = vpack.c.b16 %v975, %v974
        %978 = vst [vmem:[#allocation2 + $0x28] sm:$0xff] %v976
        %979 = vrot.lane.b32.xlu0 %v882, 113
        %v980 = vpop.permute.xlu0 %979
        %981 = vrot.lane.b32.xlu0 %v883, 113
        %v982 = vpop.permute.xlu0 %981
        %v983 = vsel %vm648, %v980, %v982
        %v984 = vsel %vm648, %v982, %v980
        %v985 = vmul.f32 %v983, %v654
        %v986 = vmul.f32 %v984, %v658
        %v987 = vpack.c.bf16 %v985, %v985
        %v988 = vpack.c.bf16 %v986, %v986
        %v991 = vunpack.c.l.b16 %v987
        %v992 = vunpack.c.l.b16 %v988
        %v993 = vpack.c.b16 %v992, %v991
        %995 = vst [vmem:[#allocation2 + $0x30] sm:$0xff] %v993
        %996 = vrot.lane.b32.xlu0 %v882, 112
        %v997 = vpop.permute.xlu0 %996
        %998 = vrot.lane.b32.xlu0 %v883, 112
        %v999 = vpop.permute.xlu0 %998
        %v1000 = vsel %vm674, %v997, %v999
        %v1001 = vsel %vm674, %v999, %v997
        %v1002 = vmul.f32 %v1000, %v680
        %v1003 = vmul.f32 %v1001, %v684
        %v1004 = vpack.c.bf16 %v1002, %v1002
        %v1005 = vpack.c.bf16 %v1003, %v1003
        %v1008 = vunpack.c.l.b16 %v1004
        %v1009 = vunpack.c.l.b16 %v1005
        %v1010 = vpack.c.b16 %v1009, %v1008
        %1012 = vst [vmem:[#allocation2 + $0x38] sm:$0xff] %v1010
        %1013 = vrot.lane.b32.xlu0 %v882, 111
        %v1014 = vpop.permute.xlu0 %1013
        %1015 = vrot.lane.b32.xlu0 %v883, 111
        %v1016 = vpop.permute.xlu0 %1015
        %v1017 = vsel %vm701, %v1014, %v1016
        %v1018 = vsel %vm701, %v1016, %v1014
        %v1019 = vmul.f32 %v1017, %v707
        %v1020 = vmul.f32 %v1018, %v711
        %v1021 = vpack.c.bf16 %v1019, %v1019
        %v1022 = vpack.c.bf16 %v1020, %v1020
        %v1025 = vunpack.c.l.b16 %v1021
        %v1026 = vunpack.c.l.b16 %v1022
        %v1027 = vpack.c.b16 %v1026, %v1025
        %1029 = vst [vmem:[#allocation2 + $0x40] sm:$0xff] %v1027
        %v1030 = vld [vmem:[#allocation2] sm:$0xff]
        %v1031 = vld [vmem:[#allocation2 + $0x8] sm:$0xff]
        %v1032 = vld [vmem:[#allocation2 + $0x10] sm:$0xff]
        %v1033 = vld [vmem:[#allocation2 + $0x18] sm:$0xff]
        %v1034 = vld [vmem:[#allocation2 + $0x20] sm:$0xff]
        %v1035 = vld [vmem:[#allocation2 + $0x28] sm:$0xff]
        %v1036 = vld [vmem:[#allocation2 + $0x30] sm:$0xff]
        %v1037 = vld [vmem:[#allocation2 + $0x38] sm:$0xff]
        %v1038 = vld [vmem:[#allocation2 + $0x40] sm:$0xff]
        %v1039 = vld [vmem:[%s7] sm:$0xff]
        %1041 = vset.pattern.permute.xlu0 0
        %1042 = vperm.xlu0 %1041, %v1039
        %v1043 = vpop.permute.xlu0 %1042
        %v1054 = vunpack.c.l.b16 %v1030
        %v1055 = vunpack.c.h.b16 %v1030
        %v1056 = vunpack.c.l.b16 %v1031
        %v1057 = vunpack.c.h.b16 %v1031
        %v1058 = vunpack.c.l.b16 %v1032
        %v1059 = vunpack.c.h.b16 %v1032
        %v1060 = vunpack.c.l.b16 %v1033
        %v1061 = vunpack.c.h.b16 %v1033
        %v1062 = vunpack.c.l.b16 %v1034
        %v1063 = vunpack.c.h.b16 %v1034
        %v1064 = vunpack.c.l.b16 %v1035
        %v1065 = vunpack.c.h.b16 %v1035
        %v1066 = vunpack.c.l.b16 %v1036
        %v1067 = vunpack.c.h.b16 %v1036
        %v1068 = vunpack.c.l.b16 %v1037
        %v1069 = vunpack.c.h.b16 %v1037
        %v1070 = vunpack.c.l.b16 %v1038
        %v1071 = vunpack.c.h.b16 %v1038
        %v1072 = vpack.c.b16 %v1056, %v1054
        %v1073 = vpack.c.b16 %v1057, %v1055
        %v1074 = vpack.c.b16 %v1060, %v1058
        %v1075 = vpack.c.b16 %v1061, %v1059
        %v1076 = vpack.c.b16 %v1064, %v1062
        %v1077 = vpack.c.b16 %v1065, %v1063
        %v1078 = vpack.c.b16 %v1068, %v1066
        %v1079 = vpack.c.b16 %v1069, %v1067
        %v1080 = vpack.c.b16 %v1070, %v1070
        %v1081 = vpack.c.b16 %v1071, %v1071
        %vm1090 = vcmask 588800
        %v1092 = vsel %vm1090, %v884, 0
        %v1095 = vsel %vm830, %v1080, 0
        %v1098 = vsel %vm830, %v1081, 0
        %1100 = vmatprep.subr.bf16.mxu0 0
        %1101 = vmatpush1.bf16.msra.mxu0 0
        %1102 = vmatprep.subr.bf16.mxu0 0
        %1103 = vmatpush1.bf16.msra.mxu0 0
        %1104 = vmatprep.subr.bf16.mxu0 0
        %1105 = vmatpush1.bf16.msra.mxu0 0
        %1106 = vmatprep.subr.bf16.mxu0 %v1098
        %1107 = vmatpush1.bf16.msra.mxu0 %v1095
        %1108 = vmatprep.subr.bf16.mxu0 %v1079
        %1109 = vmatpush1.bf16.msra.mxu0 %v1078
        %1110 = vmatprep.subr.bf16.mxu0 %v1077
        %1111 = vmatpush1.bf16.msra.mxu0 %v1076
        %1112 = vmatprep.subr.bf16.mxu0 %v1075
        %1113 = vmatpush1.bf16.msra.mxu0 %v1074
        %1114 = vmatprep.subr.bf16.mxu0 %v1073
        %1115 = vmatpush1.bf16.msra.mxu0 %v1072
        %1116 = vmatprep.subr.bf16.mxu0 0
        %1117 = vmatpush2.bf16.msra.mxu0 0
        %1118 = vmatprep.subr.bf16.mxu0 0
        %1119 = vmatpush2.bf16.msra.mxu0 0
        %1120 = vmatprep.subr.bf16.mxu0 0
        %1121 = vmatpush2.bf16.msra.mxu0 0
        %1122 = vmatprep.subr.bf16.mxu0 0
        %1123 = vmatpush2.bf16.msra.mxu0 0
        %1124 = vmatprep.subr.bf16.mxu0 0
        %1125 = vmatpush2.bf16.msra.mxu0 0
        %1126 = vmatprep.subr.bf16.mxu0 0
        %1127 = vmatpush2.bf16.msra.mxu0 0
        %1128 = vmatprep.subr.bf16.mxu0 0
        %1129 = vmatpush2.bf16.msra.mxu0 0
        %1130 = vmatprep.subr.bf16.mxu0 0
        %1131 = vmatpush2.bf16.msra.mxu0 0
        %1132 = vmatprep.mubr.bf16.mxu0 0
        %1133 = vmatmul.mubr.bf16.gmra.mxu0 %v1092
        %v1134 = vpop.f32.mrf.mxu0
        %v1135 = vadd.f32 %v1043, %v1134
        %v1136 = vpop.f32.mrf.mxu0
        %v1137 = vadd.f32 %v1043, %v1136
        %v1138 = vpop.f32.mrf.mxu0
        %v1139 = vpop.f32.mrf.mxu0
        %1140 = vdwg.mxu0
        %v1141 = vmul.f32 %v1135, 0.5
        %v1142 = vmul.f32 %v1137, 0.5
        %v1143 = vtanh.pop %v1141
        %v1144 = vtanh.pop %v1142
        %v1145 = vmul.f32 %v1143, 1.442695
        %v1146 = vpow.pop %v1145
        %v1147 = vmul.f32 %v1144, 1.442695
        %v1148 = vpow.pop %v1147
        %v1149 = vmul.f32 %v489, %v1146
        %v1150 = vmul.f32 %v490, %v1148
        %v1153 = vrot.slane %v1135, 4
        %v1154 = vrot.slane %v1137, 4
        %v1157 = vadd.f32 %v1149, %v1153
        %v1158 = vadd.f32 %v1150, %v1154
        %v1159 = vld [vmem:[%s8] sm:$0xf]
        %1160 = vrot.lane.b32.xlu0 %v1157, 17
        %v1161 = vpop.permute.xlu0 %1160
        %1162 = vrot.lane.b32.xlu0 %v1158, 17
        %v1163 = vpop.permute.xlu0 %1162
        %v1164 = vsel %vm504, %v1161, %v1163
        %v1165 = vsel %vm504, %v1163, %v1161
        %v1166 = vmul.f32 %v1165, %v510
        %v1167 = vmul.f32 %v1164, %v514
        %v1168 = vpack.c.bf16 %v1166, %v1166
        %v1169 = vpack.c.bf16 %v1167, %v1167
        %v1172 = vunpack.c.l.b16 %v1168
        %v1173 = vunpack.c.l.b16 %v1169
        %v1174 = vpack.c.b16 %v1173, %v1172
        %1176 = vst [vmem:[#allocation2] sm:$0x33] %v1174
        %1177 = vrot.lane.b32.xlu0 %v1157, 16
        %v1178 = vpop.permute.xlu0 %1177
        %1179 = vrot.lane.b32.xlu0 %v1158, 16
        %v1180 = vpop.permute.xlu0 %1179
        %v1181 = vsel %vm530, %v1178, %v1180
        %v1182 = vsel %vm530, %v1180, %v1178
        %v1183 = vmul.f32 %v1182, %v536
        %v1184 = vmul.f32 %v1181, %v540
        %v1185 = vpack.c.bf16 %v1183, %v1183
        %v1186 = vpack.c.bf16 %v1184, %v1184
        %v1189 = vunpack.c.l.b16 %v1185
        %v1190 = vunpack.c.l.b16 %v1186
        %v1191 = vpack.c.b16 %v1190, %v1189
        %v1192 = vrot.slane %v1191, 6
        %1194 = vst [vmem:[#allocation2] sm:$0xcc] %v1192
        %1195 = vrot.lane.b32.xlu0 %v1157, 15
        %v1196 = vpop.permute.xlu0 %1195
        %1197 = vrot.lane.b32.xlu0 %v1158, 15
        %v1198 = vpop.permute.xlu0 %1197
        %v1199 = vsel %vm557, %v1196, %v1198
        %v1200 = vsel %vm557, %v1198, %v1196
        %v1201 = vmul.f32 %v1200, %v563
        %v1202 = vmul.f32 %v1199, %v567
        %v1203 = vpack.c.bf16 %v1201, %v1201
        %v1204 = vpack.c.bf16 %v1202, %v1202
        %v1207 = vunpack.c.l.b16 %v1203
        %v1208 = vunpack.c.l.b16 %v1204
        %v1209 = vpack.c.b16 %v1208, %v1207
        %1211 = vst [vmem:[#allocation2 + $0x8] sm:$0x33] %v1209
        %1212 = vrot.lane.b32.xlu0 %v1157, 1
        %v1213 = vpop.permute.xlu0 %1212
        %1214 = vrot.lane.b32.xlu0 %v1158, 1
        %v1215 = vpop.permute.xlu0 %1214
        %v1216 = vsel %vm583, %v1213, %v1215
        %v1217 = vsel %vm583, %v1215, %v1213
        %v1218 = vmul.f32 %v1217, %v589
        %v1219 = vmul.f32 %v1216, %v593
        %v1220 = vpack.c.bf16 %v1218, %v1218
        %v1221 = vpack.c.bf16 %v1219, %v1219
        %v1224 = vunpack.c.l.b16 %v1220
        %v1225 = vunpack.c.l.b16 %v1221
        %v1226 = vpack.c.b16 %v1225, %v1224
        %v1227 = vrot.slane %v1226, 6
        %1229 = vst [vmem:[#allocation2 + $0x8] sm:$0xcc] %v1227
        %v1230 = vpack.c.bf16 %v1157, %v1157
        %v1231 = vpack.c.bf16 %v1158, %v1158
        %v1234 = vunpack.c.l.b16 %v1230
        %v1235 = vunpack.c.l.b16 %v1231
        %v1236 = vpack.c.b16 %v1235, %v1234
        %1238 = vst [vmem:[#allocation2 + $0x10] sm:$0x33] %v1236
        %1239 = vrot.lane.b32.xlu0 %v1157, 127
        %v1240 = vpop.permute.xlu0 %1239
        %1241 = vrot.lane.b32.xlu0 %v1158, 127
        %v1242 = vpop.permute.xlu0 %1241
        %v1243 = vsel %vm621, %v1240, %v1242
        %v1244 = vsel %vm621, %v1242, %v1240
        %v1245 = vmul.f32 %v1243, %v627
        %v1246 = vmul.f32 %v1244, %v631
        %v1247 = vpack.c.bf16 %v1245, %v1245
        %v1248 = vpack.c.bf16 %v1246, %v1246
        %v1251 = vunpack.c.l.b16 %v1247
        %v1252 = vunpack.c.l.b16 %v1248
        %v1253 = vpack.c.b16 %v1252, %v1251
        %v1254 = vrot.slane %v1253, 6
        %1256 = vst [vmem:[#allocation2 + $0x10] sm:$0xcc] %v1254
        %1257 = vrot.lane.b32.xlu0 %v1157, 113
        %v1258 = vpop.permute.xlu0 %1257
        %1259 = vrot.lane.b32.xlu0 %v1158, 113
        %v1260 = vpop.permute.xlu0 %1259
        %v1261 = vsel %vm648, %v1258, %v1260
        %v1262 = vsel %vm648, %v1260, %v1258
        %v1263 = vmul.f32 %v1261, %v654
        %v1264 = vmul.f32 %v1262, %v658
        %v1265 = vpack.c.bf16 %v1263, %v1263
        %v1266 = vpack.c.bf16 %v1264, %v1264
        %v1269 = vunpack.c.l.b16 %v1265
        %v1270 = vunpack.c.l.b16 %v1266
        %v1271 = vpack.c.b16 %v1270, %v1269
        %1273 = vst [vmem:[#allocation2 + $0x18] sm:$0x33] %v1271
        %1274 = vrot.lane.b32.xlu0 %v1157, 112
        %v1275 = vpop.permute.xlu0 %1274
        %1276 = vrot.lane.b32.xlu0 %v1158, 112
        %v1277 = vpop.permute.xlu0 %1276
        %v1278 = vsel %vm674, %v1275, %v1277
        %v1279 = vsel %vm674, %v1277, %v1275
        %v1280 = vmul.f32 %v1278, %v680
        %v1281 = vmul.f32 %v1279, %v684
        %v1282 = vpack.c.bf16 %v1280, %v1280
        %v1283 = vpack.c.bf16 %v1281, %v1281
        %v1286 = vunpack.c.l.b16 %v1282
        %v1287 = vunpack.c.l.b16 %v1283
        %v1288 = vpack.c.b16 %v1287, %v1286
        %v1289 = vrot.slane %v1288, 6
        %1291 = vst [vmem:[#allocation2 + $0x18] sm:$0xcc] %v1289
        %1292 = vrot.lane.b32.xlu0 %v1157, 111
        %v1293 = vpop.permute.xlu0 %1292
        %1294 = vrot.lane.b32.xlu0 %v1158, 111
        %v1295 = vpop.permute.xlu0 %1294
        %v1296 = vsel %vm701, %v1293, %v1295
        %v1297 = vsel %vm701, %v1295, %v1293
        %v1298 = vmul.f32 %v1296, %v707
        %v1299 = vmul.f32 %v1297, %v711
        %v1300 = vpack.c.bf16 %v1298, %v1298
        %v1301 = vpack.c.bf16 %v1299, %v1299
        %v1304 = vunpack.c.l.b16 %v1300
        %v1305 = vunpack.c.l.b16 %v1301
        %v1306 = vpack.c.b16 %v1305, %v1304
        %1308 = vst [vmem:[#allocation2 + $0x20] sm:$0x33] %v1306
        %v1309 = vld [vmem:[#allocation2] sm:$0xff]
        %v1310 = vld [vmem:[#allocation2 + $0x8] sm:$0xff]
        %v1311 = vld [vmem:[#allocation2 + $0x10] sm:$0xff]
        %v1312 = vld [vmem:[#allocation2 + $0x18] sm:$0xff]
        %v1313 = vld [vmem:[#allocation2 + $0x20] sm:$0x33]
        %v1314 = vld [vmem:[%s9] sm:$0xff]
        %1316 = vset.pattern.permute.xlu0 0
        %1317 = vperm.xlu0 %1316, %v1314
        %v1318 = vpop.permute.xlu0 %1317
        %v1325 = vunpack.c.l.b16 %v1309
        %v1326 = vunpack.c.h.b16 %v1309
        %v1327 = vunpack.c.l.b16 %v1310
        %v1328 = vunpack.c.h.b16 %v1310
        %v1329 = vunpack.c.l.b16 %v1311
        %v1330 = vunpack.c.h.b16 %v1311
        %v1331 = vunpack.c.l.b16 %v1312
        %v1332 = vunpack.c.h.b16 %v1312
        %v1333 = vunpack.c.l.b16 %v1313
        %v1334 = vunpack.c.h.b16 %v1313
        %v1335 = vpack.c.b16 %v1327, %v1325
        %v1336 = vpack.c.b16 %v1328, %v1326
        %v1337 = vpack.c.b16 %v1331, %v1329
        %v1338 = vpack.c.b16 %v1332, %v1330
        %v1339 = vpack.c.b16 %v1333, %v1333
        %v1340 = vpack.c.b16 %v1334, %v1334
        %v1346 = vsel %vm759, %v1159, 0
        %v1349 = vsel %vm763, %v1339, 0
        %v1352 = vsel %vm763, %v1340, 0
        %1354 = vmatprep.subr.bf16.mxu0 0
        %1355 = vmatpush1.bf16.msra.mxu0 0
        %1356 = vmatprep.subr.bf16.mxu0 0
        %1357 = vmatpush1.bf16.msra.mxu0 0
        %1358 = vmatprep.subr.bf16.mxu0 0
        %1359 = vmatpush1.bf16.msra.mxu0 0
        %1360 = vmatprep.subr.bf16.mxu0 0
        %1361 = vmatpush1.bf16.msra.mxu0 0
        %1362 = vmatprep.subr.bf16.mxu0 0
        %1363 = vmatpush1.bf16.msra.mxu0 0
        %1364 = vmatprep.subr.bf16.mxu0 %v1352
        %1365 = vmatpush1.bf16.msra.mxu0 %v1349
        %1366 = vmatprep.subr.bf16.mxu0 %v1338
        %1367 = vmatpush1.bf16.msra.mxu0 %v1337
        %1368 = vmatprep.subr.bf16.mxu0 %v1336
        %1369 = vmatpush1.bf16.msra.mxu0 %v1335
        %1370 = vmatprep.subr.bf16.mxu0 0
        %1371 = vmatpush2.bf16.msra.mxu0 0
        %1372 = vmatprep.subr.bf16.mxu0 0
        %1373 = vmatpush2.bf16.msra.mxu0 0
        %1374 = vmatprep.subr.bf16.mxu0 0
        %1375 = vmatpush2.bf16.msra.mxu0 0
        %1376 = vmatprep.subr.bf16.mxu0 0
        %1377 = vmatpush2.bf16.msra.mxu0 0
        %1378 = vmatprep.subr.bf16.mxu0 0
        %1379 = vmatpush2.bf16.msra.mxu0 0
        %1380 = vmatprep.subr.bf16.mxu0 0
        %1381 = vmatpush2.bf16.msra.mxu0 0
        %1382 = vmatprep.subr.bf16.mxu0 0
        %1383 = vmatpush2.bf16.msra.mxu0 0
        %1384 = vmatprep.subr.bf16.mxu0 0
        %1385 = vmatpush2.bf16.msra.mxu0 0
        %1386 = vmatprep.mubr.bf16.mxu0 0
        %1387 = vmatmul.mubr.bf16.gmra.mxu0 %v1346
        %v1388 = vpop.f32.mrf.mxu0
        %v1389 = vadd.f32 %v1318, %v1388
        %v1390 = vpop.f32.mrf.mxu0
        %v1391 = vadd.f32 %v1318, %v1390
        %v1392 = vpop.f32.mrf.mxu0
        %v1393 = vpop.f32.mrf.mxu0
        %1394 = vdwg.mxu0
        %vm1395 = vcmp.gt.f32.partialorder %v1389, 0.0
        %vm1396 = vcmp.gt.f32.partialorder %v1391, 0.0
        %v1397 = vmul.f32 %v1389, 0.2
        %v1398 = vmul.f32 %v1391, 0.2
        %v1399 = vsel %vm1395, %v1389, %v1397
        %v1400 = vsel %vm1396, %v1391, %v1398
        %v1401 = vld [vmem:[%s10] sm:$0xf]
        %v1402 = vpack.c.bf16 %v1399, %v1399
        %v1403 = vpack.c.bf16 %v1400, %v1400
        %v1404 = vld [vmem:[%s11] sm:$0xff]
        %1406 = vset.pattern.permute.xlu0 0
        %1407 = vperm.xlu0 %1406, %v1404
        %v1408 = vpop.permute.xlu0 %1407
        %v1411 = vsel %vm826, %v1401, 0
        %v1414 = vsel %vm830, %v1402, 0
        %v1417 = vsel %vm830, %v1403, 0
        %1419 = vmatprep.subr.bf16.mxu0 0
        %1420 = vmatpush1.bf16.msra.mxu0 0
        %1421 = vmatprep.subr.bf16.mxu0 0
        %1422 = vmatpush1.bf16.msra.mxu0 0
        %1423 = vmatprep.subr.bf16.mxu0 0
        %1424 = vmatpush1.bf16.msra.mxu0 0
        %1425 = vmatprep.subr.bf16.mxu0 0
        %1426 = vmatpush1.bf16.msra.mxu0 0
        %1427 = vmatprep.subr.bf16.mxu0 0
        %1428 = vmatpush1.bf16.msra.mxu0 0
        %1429 = vmatprep.subr.bf16.mxu0 0
        %1430 = vmatpush1.bf16.msra.mxu0 0
        %1431 = vmatprep.subr.bf16.mxu0 0
        %1432 = vmatpush1.bf16.msra.mxu0 0
        %1433 = vmatprep.subr.bf16.mxu0 %v1417
        %1434 = vmatpush1.bf16.msra.mxu0 %v1414
        %1435 = vmatprep.subr.bf16.mxu0 0
        %1436 = vmatpush2.bf16.msra.mxu0 0
        %1437 = vmatprep.subr.bf16.mxu0 0
        %1438 = vmatpush2.bf16.msra.mxu0 0
        %1439 = vmatprep.subr.bf16.mxu0 0
        %1440 = vmatpush2.bf16.msra.mxu0 0
        %1441 = vmatprep.subr.bf16.mxu0 0
        %1442 = vmatpush2.bf16.msra.mxu0 0
        %1443 = vmatprep.subr.bf16.mxu0 0
        %1444 = vmatpush2.bf16.msra.mxu0 0
        %1445 = vmatprep.subr.bf16.mxu0 0
        %1446 = vmatpush2.bf16.msra.mxu0 0
        %1447 = vmatprep.subr.bf16.mxu0 0
        %1448 = vmatpush2.bf16.msra.mxu0 0
        %1449 = vmatprep.subr.bf16.mxu0 0
        %1450 = vmatpush2.bf16.msra.mxu0 0
        %1451 = vmatprep.mubr.bf16.mxu0 0
        %1452 = vmatmul.mubr.bf16.gmra.mxu0 %v1411
        %v1453 = vpop.f32.mrf.mxu0
        %v1454 = vadd.f32 %v1408, %v1453
        %v1455 = vpop.f32.mrf.mxu0
        %v1456 = vadd.f32 %v1408, %v1455
        %v1457 = vpop.f32.mrf.mxu0
        %v1458 = vpop.f32.mrf.mxu0
        %1459 = vdwg.mxu0
        %vm1460 = vcmp.gt.f32.partialorder %v1454, 0.0
        %vm1461 = vcmp.gt.f32.partialorder %v1456, 0.0
        %v1462 = vmul.f32 %v1454, 0.2
        %v1463 = vmul.f32 %v1456, 0.2
        %v1464 = vsel %vm1460, %v1454, %v1462
        %v1465 = vsel %vm1461, %v1456, %v1463
        %v1466 = vld [vmem:[%s12] sm:$0xf]
        %1467 = vrot.lane.b32.xlu0 %v1464, 17
        %v1468 = vpop.permute.xlu0 %1467
        %1469 = vrot.lane.b32.xlu0 %v1465, 17
        %v1470 = vpop.permute.xlu0 %1469
        %v1471 = vsel %vm504, %v1468, %v1470
        %v1472 = vsel %vm504, %v1470, %v1468
        %v1473 = vmul.f32 %v1472, %v510
        %v1474 = vmul.f32 %v1471, %v514
        %v1475 = vpack.c.bf16 %v1473, %v1473
        %v1476 = vpack.c.bf16 %v1474, %v1474
        %v1479 = vunpack.c.l.b16 %v1475
        %v1480 = vunpack.c.l.b16 %v1476
        %v1481 = vpack.c.b16 %v1480, %v1479
        %1483 = vst [vmem:[#allocation2] sm:$0xff] %v1481
        %1484 = vrot.lane.b32.xlu0 %v1464, 16
        %v1485 = vpop.permute.xlu0 %1484
        %1486 = vrot.lane.b32.xlu0 %v1465, 16
        %v1487 = vpop.permute.xlu0 %1486
        %v1488 = vsel %vm530, %v1485, %v1487
        %v1489 = vsel %vm530, %v1487, %v1485
        %v1490 = vmul.f32 %v1489, %v536
        %v1491 = vmul.f32 %v1488, %v540
        %v1492 = vpack.c.bf16 %v1490, %v1490
        %v1493 = vpack.c.bf16 %v1491, %v1491
        %v1496 = vunpack.c.l.b16 %v1492
        %v1497 = vunpack.c.l.b16 %v1493
        %v1498 = vpack.c.b16 %v1497, %v1496
        %1500 = vst [vmem:[#allocation2 + $0x8] sm:$0xff] %v1498
        %1501 = vrot.lane.b32.xlu0 %v1464, 15
        %v1502 = vpop.permute.xlu0 %1501
        %1503 = vrot.lane.b32.xlu0 %v1465, 15
        %v1504 = vpop.permute.xlu0 %1503
        %v1505 = vsel %vm557, %v1502, %v1504
        %v1506 = vsel %vm557, %v1504, %v1502
        %v1507 = vmul.f32 %v1506, %v563
        %v1508 = vmul.f32 %v1505, %v567
        %v1509 = vpack.c.bf16 %v1507, %v1507
        %v1510 = vpack.c.bf16 %v1508, %v1508
        %v1513 = vunpack.c.l.b16 %v1509
        %v1514 = vunpack.c.l.b16 %v1510
        %v1515 = vpack.c.b16 %v1514, %v1513
        %1517 = vst [vmem:[#allocation2 + $0x10] sm:$0xff] %v1515
        %1518 = vrot.lane.b32.xlu0 %v1464, 1
        %v1519 = vpop.permute.xlu0 %1518
        %1520 = vrot.lane.b32.xlu0 %v1465, 1
        %v1521 = vpop.permute.xlu0 %1520
        %v1522 = vsel %vm583, %v1519, %v1521
        %v1523 = vsel %vm583, %v1521, %v1519
        %v1524 = vmul.f32 %v1523, %v589
        %v1525 = vmul.f32 %v1522, %v593
        %v1526 = vpack.c.bf16 %v1524, %v1524
        %v1527 = vpack.c.bf16 %v1525, %v1525
        %v1530 = vunpack.c.l.b16 %v1526
        %v1531 = vunpack.c.l.b16 %v1527
        %v1532 = vpack.c.b16 %v1531, %v1530
        %1534 = vst [vmem:[#allocation2 + $0x18] sm:$0xff] %v1532
        %v1535 = vpack.c.bf16 %v1464, %v1464
        %v1536 = vpack.c.bf16 %v1465, %v1465
        %v1539 = vunpack.c.l.b16 %v1535
        %v1540 = vunpack.c.l.b16 %v1536
        %v1541 = vpack.c.b16 %v1540, %v1539
        %1543 = vst [vmem:[#allocation2 + $0x20] sm:$0xff] %v1541
        %1544 = vrot.lane.b32.xlu0 %v1464, 127
        %v1545 = vpop.permute.xlu0 %1544
        %1546 = vrot.lane.b32.xlu0 %v1465, 127
        %v1547 = vpop.permute.xlu0 %1546
        %v1548 = vsel %vm621, %v1545, %v1547
        %v1549 = vsel %vm621, %v1547, %v1545
        %v1550 = vmul.f32 %v1548, %v627
        %v1551 = vmul.f32 %v1549, %v631
        %v1552 = vpack.c.bf16 %v1550, %v1550
        %v1553 = vpack.c.bf16 %v1551, %v1551
        %v1556 = vunpack.c.l.b16 %v1552
        %v1557 = vunpack.c.l.b16 %v1553
        %v1558 = vpack.c.b16 %v1557, %v1556
        %1560 = vst [vmem:[#allocation2 + $0x28] sm:$0xff] %v1558
        %1561 = vrot.lane.b32.xlu0 %v1464, 113
        %v1562 = vpop.permute.xlu0 %1561
        %1563 = vrot.lane.b32.xlu0 %v1465, 113
        %v1564 = vpop.permute.xlu0 %1563
        %v1565 = vsel %vm648, %v1562, %v1564
        %v1566 = vsel %vm648, %v1564, %v1562
        %v1567 = vmul.f32 %v1565, %v654
        %v1568 = vmul.f32 %v1566, %v658
        %v1569 = vpack.c.bf16 %v1567, %v1567
        %v1570 = vpack.c.bf16 %v1568, %v1568
        %v1573 = vunpack.c.l.b16 %v1569
        %v1574 = vunpack.c.l.b16 %v1570
        %v1575 = vpack.c.b16 %v1574, %v1573
        %1577 = vst [vmem:[#allocation2 + $0x30] sm:$0xff] %v1575
        %1578 = vrot.lane.b32.xlu0 %v1464, 112
        %v1579 = vpop.permute.xlu0 %1578
        %1580 = vrot.lane.b32.xlu0 %v1465, 112
        %v1581 = vpop.permute.xlu0 %1580
        %v1582 = vsel %vm674, %v1579, %v1581
        %v1583 = vsel %vm674, %v1581, %v1579
        %v1584 = vmul.f32 %v1582, %v680
        %v1585 = vmul.f32 %v1583, %v684
        %v1586 = vpack.c.bf16 %v1584, %v1584
        %v1587 = vpack.c.bf16 %v1585, %v1585
        %v1590 = vunpack.c.l.b16 %v1586
        %v1591 = vunpack.c.l.b16 %v1587
        %v1592 = vpack.c.b16 %v1591, %v1590
        %1594 = vst [vmem:[#allocation2 + $0x38] sm:$0xff] %v1592
        %1595 = vrot.lane.b32.xlu0 %v1464, 111
        %v1596 = vpop.permute.xlu0 %1595
        %1597 = vrot.lane.b32.xlu0 %v1465, 111
        %v1598 = vpop.permute.xlu0 %1597
        %v1599 = vsel %vm701, %v1596, %v1598
        %v1600 = vsel %vm701, %v1598, %v1596
        %v1601 = vmul.f32 %v1599, %v707
        %v1602 = vmul.f32 %v1600, %v711
        %v1603 = vpack.c.bf16 %v1601, %v1601
        %v1604 = vpack.c.bf16 %v1602, %v1602
        %v1607 = vunpack.c.l.b16 %v1603
        %v1608 = vunpack.c.l.b16 %v1604
        %v1609 = vpack.c.b16 %v1608, %v1607
        %1611 = vst [vmem:[#allocation2 + $0x40] sm:$0xff] %v1609
        %v1612 = vld [vmem:[#allocation2] sm:$0xff]
        %v1613 = vld [vmem:[#allocation2 + $0x8] sm:$0xff]
        %v1614 = vld [vmem:[#allocation2 + $0x10] sm:$0xff]
        %v1615 = vld [vmem:[#allocation2 + $0x18] sm:$0xff]
        %v1616 = vld [vmem:[#allocation2 + $0x20] sm:$0xff]
        %v1617 = vld [vmem:[#allocation2 + $0x28] sm:$0xff]
        %v1618 = vld [vmem:[#allocation2 + $0x30] sm:$0xff]
        %v1619 = vld [vmem:[#allocation2 + $0x38] sm:$0xff]
        %v1620 = vld [vmem:[#allocation2 + $0x40] sm:$0xff]
        %v1621 = vld [vmem:[%s13] sm:$0xff]
        %1623 = vset.pattern.permute.xlu0 0
        %1624 = vperm.xlu0 %1623, %v1621
        %v1625 = vpop.permute.xlu0 %1624
        %v1636 = vunpack.c.l.b16 %v1612
        %v1637 = vunpack.c.h.b16 %v1612
        %v1638 = vunpack.c.l.b16 %v1613
        %v1639 = vunpack.c.h.b16 %v1613
        %v1640 = vunpack.c.l.b16 %v1614
        %v1641 = vunpack.c.h.b16 %v1614
        %v1642 = vunpack.c.l.b16 %v1615
        %v1643 = vunpack.c.h.b16 %v1615
        %v1644 = vunpack.c.l.b16 %v1616
        %v1645 = vunpack.c.h.b16 %v1616
        %v1646 = vunpack.c.l.b16 %v1617
        %v1647 = vunpack.c.h.b16 %v1617
        %v1648 = vunpack.c.l.b16 %v1618
        %v1649 = vunpack.c.h.b16 %v1618
        %v1650 = vunpack.c.l.b16 %v1619
        %v1651 = vunpack.c.h.b16 %v1619
        %v1652 = vunpack.c.l.b16 %v1620
        %v1653 = vunpack.c.h.b16 %v1620
        %v1654 = vpack.c.b16 %v1638, %v1636
        %v1655 = vpack.c.b16 %v1639, %v1637
        %v1656 = vpack.c.b16 %v1642, %v1640
        %v1657 = vpack.c.b16 %v1643, %v1641
        %v1658 = vpack.c.b16 %v1646, %v1644
        %v1659 = vpack.c.b16 %v1647, %v1645
        %v1660 = vpack.c.b16 %v1650, %v1648
        %v1661 = vpack.c.b16 %v1651, %v1649
        %v1662 = vpack.c.b16 %v1652, %v1652
        %v1663 = vpack.c.b16 %v1653, %v1653
        %v1673 = vsel %vm1090, %v1466, 0
        %v1676 = vsel %vm830, %v1662, 0
        %v1679 = vsel %vm830, %v1663, 0
        %1681 = vmatprep.subr.bf16.mxu0 0
        %1682 = vmatpush1.bf16.msra.mxu0 0
        %1683 = vmatprep.subr.bf16.mxu0 0
        %1684 = vmatpush1.bf16.msra.mxu0 0
        %1685 = vmatprep.subr.bf16.mxu0 0
        %1686 = vmatpush1.bf16.msra.mxu0 0
        %1687 = vmatprep.subr.bf16.mxu0 %v1679
        %1688 = vmatpush1.bf16.msra.mxu0 %v1676
        %1689 = vmatprep.subr.bf16.mxu0 %v1661
        %1690 = vmatpush1.bf16.msra.mxu0 %v1660
        %1691 = vmatprep.subr.bf16.mxu0 %v1659
        %1692 = vmatpush1.bf16.msra.mxu0 %v1658
        %1693 = vmatprep.subr.bf16.mxu0 %v1657
        %1694 = vmatpush1.bf16.msra.mxu0 %v1656
        %1695 = vmatprep.subr.bf16.mxu0 %v1655
        %1696 = vmatpush1.bf16.msra.mxu0 %v1654
        %1697 = vmatprep.subr.bf16.mxu0 0
        %1698 = vmatpush2.bf16.msra.mxu0 0
        %1699 = vmatprep.subr.bf16.mxu0 0
        %1700 = vmatpush2.bf16.msra.mxu0 0
        %1701 = vmatprep.subr.bf16.mxu0 0
        %1702 = vmatpush2.bf16.msra.mxu0 0
        %1703 = vmatprep.subr.bf16.mxu0 0
        %1704 = vmatpush2.bf16.msra.mxu0 0
        %1705 = vmatprep.subr.bf16.mxu0 0
        %1706 = vmatpush2.bf16.msra.mxu0 0
        %1707 = vmatprep.subr.bf16.mxu0 0
        %1708 = vmatpush2.bf16.msra.mxu0 0
        %1709 = vmatprep.subr.bf16.mxu0 0
        %1710 = vmatpush2.bf16.msra.mxu0 0
        %1711 = vmatprep.subr.bf16.mxu0 0
        %1712 = vmatpush2.bf16.msra.mxu0 0
        %1713 = vmatprep.mubr.bf16.mxu0 0
        %1714 = vmatmul.mubr.bf16.gmra.mxu0 %v1673
        %v1715 = vpop.f32.mrf.mxu0
        %v1716 = vadd.f32 %v1625, %v1715
        %v1717 = vpop.f32.mrf.mxu0
        %v1718 = vadd.f32 %v1625, %v1717
        %v1719 = vpop.f32.mrf.mxu0
        %v1720 = vpop.f32.mrf.mxu0
        %1721 = vdwg.mxu0
        %v1722 = vmul.f32 %v1716, 0.5
        %v1723 = vmul.f32 %v1718, 0.5
        %v1724 = vtanh.pop %v1722
        %v1725 = vtanh.pop %v1723
        %v1726 = vmul.f32 %v1724, 1.442695
        %v1727 = vpow.pop %v1726
        %v1728 = vmul.f32 %v1725, 1.442695
        %v1729 = vpow.pop %v1728
        %v1732 = vrot.slane %v1727, 4
        %v1733 = vrot.slane %v1729, 4
        %v1736 = vmul.f32 %v489, %v1732
        %v1737 = vmul.f32 %v490, %v1733
        %v1738 = vadd.f32 %v1736, %v1716
        %v1739 = vadd.f32 %v1737, %v1718
        %v1740 = vsel %vm830, %v1157, %v1738
        %v1741 = vsel %vm830, %v1158, %v1739
        %1742 = vst [vmem:[%s476] sm:$0xff] %v1740
        %1743 = vst [vmem:[%s476 + $0x8] sm:$0xff] %v1741
        %s1744 = sand.u32 %s336, 1
        %s1745 = scalar_lea.sflag [#allocation5], %s1744
        %s1746 = sand.u32 %s336, 1
        %s1747 = smul.addr %s1746, 16
        %s1748 = scalar_lea.vmem [#allocation6], %s1747
        // Predicated region
        $region81: #{tpu_custom_call.1} parent=75 // pred_check
          %p1749 = pneg %p346
        $region82: #{tpu_custom_call.1} parent=75 // pred_check_branch
          %1751 = sbr.rel (%p1749) target = $region84
        $region83: #{tpu_custom_call.1} parent=75 // pred_region
          %s1752 = smul.u32 2, %s29
          %s1754 = ssub.s32 256, 256
          %1755 = vsyncadd %s1745, %s1754
          %s1756 = smul.addr %s1752, 128
          %s1757 = scalar_lea.hbm %s14, %s1756
          %s1759 = sshll.u32 %s1748, 4
          %s1760 = int_to_ptr.vmem [resolvable:$true] %s1759
          %1762 = dma.vmem_to_hbm [thread:$0]  %s1760, 256, %s1757, %s1745
        $region84: #{tpu_custom_call.1} parent=75 // pred_fallthru
          _
      $region76: #{tpu_custom_call.1} parent=5 // pred_fallthru
        _
      %p1763 = scmp.le.s32.totalorder 2, %s24
      // Predicated region
      $region85: #{tpu_custom_call.1} parent=5 // pred_check
        %p1764 = pneg %p1763
      $region86: #{tpu_custom_call.1} parent=5 // pred_check_branch
        %1766 = sbr.rel (%p1764) target = $region88
      $region87: #{tpu_custom_call.1} parent=5 // pred_region
        %s1767 = ssub.s32 %s24, 2
        // Predicated region
        $region89: #{tpu_custom_call.1} parent=87 // pred_check
          %p1768 = pneg %p352
        $region90: #{tpu_custom_call.1} parent=87 // pred_check_branch
          %1770 = sbr.rel (%p1768) target = $region92
        $region91: #{tpu_custom_call.1} parent=87 // pred_region
          %s1771 = sand.u32 %s337, 1
          %s1772 = scalar_lea.sflag [#allocation5], %s1771
          %s1773 = sand.u32 %s337, 1
          %s1774 = smul.addr %s1773, 16
          %s1775 = scalar_lea.vmem [#allocation6], %s1774
          %1776 = dma.done %s1772, 256
        $region92: #{tpu_custom_call.1} parent=87 // pred_fallthru
          _
      $region88: #{tpu_custom_call.1} parent=5 // pred_fallthru
        _
    $region6: #{tpu_custom_call.1} parent=1 // loop_footer
      %s28 = sadd.s32 1, %s24
    $region7: #{tpu_custom_call.1} parent=1 // loop_footer_branch
      %23 = sbr.rel target = $region3
    $region8: #{tpu_custom_call.1} parent=1 // loop_exit
      _
    %1777 = vsyncpa [#allocation4], 1
    %s1778 = scalar_lea.sflag [#allocation4], 1
    %1779 = vsyncpa %s1778, 1
    %1780 = vsyncpa [#allocation5], 1
    %s1781 = scalar_lea.sflag [#allocation5], 1
    %1782 = vsyncpa %s1781, 1

</llo_original>
